<compile_context>
chip_gen: v7x
topology: tpu7x:2x2x1
jax: 0.10.0
libtpu: 0.0.40
codegen_flags: <defaults>
</compile_context>

<pallas_src>
import functools

import jax
import jax.numpy as jnp
from jax import lax
from jax.experimental import pallas as pl
from jax.experimental.pallas import tpu as pltpu


def _bf16_eup_supported():
    """bf16 exp only pays off on chips with a bf16 EUP (v6e / v7x); v2-v5 stay f32."""
    try:
        kind = jax.devices()[0].device_kind.lower()
    except Exception:
        return False
    if any(t in kind for t in ("v2", "v3", "v4", "v5")):
        return False
    return any(t in kind for t in ("v6", "v7", "7x"))


def _flash_attn_kernel(x_q_ref, x_v_ref, x_k_ref,
                       wq_ref, wk_ref, wv_ref, wo_ref, bo_ref,
                       o_ref,
                       q_sc, m_sc, l_sc, acc_sc,
                       *, n_valid, tkv, need_mask, bf16_exp):
    # Grid: (batch, q_tile, head, kv_tile); kv innermost, head next (both "arbitrary").
    #   x_q_ref : (1, tq,  c)   token-major x, q tile
    #   x_v_ref : (1, tkv, c)   token-major x, kv tile (for V)
    #   x_k_ref : (1, c, tkv)   channel-major x, kv tile (for K)
    #   wq_ref  : (1, c, d)     W_q^T for this head, scale pre-folded
    #   wk_ref  : (1, d, c)     W_k  for this head
    #   wv_ref  : (1, c, d)     W_v^T for this head
    #   wo_ref  : (1, d, dim)   W_out^T slice for this head
    #   bo_ref  : (1, dim)      to_out bias
    #   o_ref   : (1, tq, dim)  token-major output tile (accumulated across heads)
    h = pl.program_id(2)
    kv = pl.program_id(3)
    num_kv = pl.num_programs(3)

    @pl.when(kv == 0)
    def _init():
        # Per-(batch, q-tile, head) state: project q once, reset online-softmax stats.
        q_sc[...] = jnp.dot(x_q_ref[0], wq_ref[0],
                            preferred_element_type=jnp.float32).astype(jnp.bfloat16)
        m_sc[...] = jnp.full(m_sc.shape, -jnp.inf, m_sc.dtype)
        l_sc[...] = jnp.zeros(l_sc.shape, l_sc.dtype)
        acc_sc[...] = jnp.zeros(acc_sc.shape, acc_sc.dtype)

    # K / V projections for this kv tile (tiny K=c contraction); bf16 from here on.
    k = jnp.dot(wk_ref[0], x_k_ref[0],
                preferred_element_type=jnp.float32).astype(jnp.bfloat16)    # (d, tkv)
    v = jnp.dot(x_v_ref[0], wv_ref[0],
                preferred_element_type=jnp.float32).astype(jnp.bfloat16)    # (tkv, d)

    # Scores for this (q tile, kv tile): native (tq, d) @ (d, tkv) MXU matmul.
    s = jnp.dot(q_sc[...], k, preferred_element_type=jnp.float32)           # (tq, tkv) f32

    if need_mask:
        col = kv * tkv + lax.broadcasted_iota(jnp.int32, s.shape, 1)
        s = jnp.where(col < n_valid, s, -1e30)

    # Online softmax update.
    m_prev = m_sc[...]
    m_new = jnp.maximum(m_prev, jnp.max(s, axis=-1, keepdims=True))
    alpha = jnp.exp(m_prev - m_new)                                         # (tq, 1) f32

    s = s - m_new
    if bf16_exp:
        p = jnp.exp(s.astype(jnp.bfloat16))                                 # bf16 EUP exp
        l_blk = jnp.sum(p.astype(jnp.float32), axis=-1, keepdims=True)      # f32 accumulate
    else:
        p_f32 = jnp.exp(s)
        l_blk = jnp.sum(p_f32, axis=-1, keepdims=True)
        p = p_f32.astype(jnp.bfloat16)

    m_sc[...] = m_new
    l_sc[...] = alpha * l_sc[...] + l_blk
    acc_sc[...] = alpha * acc_sc[...] + jnp.dot(p, v,
                                                preferred_element_type=jnp.float32)

    @pl.when(kv == num_kv - 1)
    def _finalize():
        # Normalize AFTER the PV matmul: O(tq*d) multiply instead of O(tq*tkv).
        out_t = acc_sc[...] * pl.reciprocal(l_sc[...], approx=True)         # (tq, d) f32
        # Per-head slice of the to_out 1x1 conv; accumulate across the heads grid axis.
        y = jnp.dot(out_t, wo_ref[0], preferred_element_type=jnp.float32)   # (tq, dim)

        @pl.when(h == 0)
        def _():
            o_ref[0] = (y + bo_ref[...]).astype(o_ref.dtype)

        @pl.when(h != 0)
        def _():
            o_ref[0] = o_ref[0] + y.astype(o_ref.dtype)


def _forward(x, w_qkv, w_out, b_out, *, heads, dim_head, bf16_exp):
    bsz, c, n = x.shape
    hidden = heads * dim_head
    dim = w_out.shape[0]
    scale = float(dim_head) ** (-0.5)

    # Tile sizes: lane-dense (multiple of 128), sized well under the v7x 32 MiB scoped /
    # 64 MiB physical VMEM budget (score block + K/V tiles + accumulators << 1 MiB).
    tile = 128 if n <= 128 else 256
    n_pad = ((n + tile - 1) // tile) * tile
    tq = tkv = tile

    x_p = jnp.pad(x, ((0, 0), (0, 0), (0, n_pad - n))) if n_pad != n else x
    x_cm = x_p                                  # (b, c, n_pad)   channel-major (for K)
    x_tm = jnp.transpose(x_p, (0, 2, 1))        # (b, n_pad, c)   token-major   (for Q, V)

    # One-time weight re-layouts (per-head, pre-transposed to native MXU orientation).
    wq_t = jnp.transpose(w_qkv[:hidden].reshape(heads, dim_head, c), (0, 2, 1)) * scale
    wk = w_qkv[hidden:2 * hidden].reshape(heads, dim_head, c)
    wv_t = jnp.transpose(w_qkv[2 * hidden:].reshape(heads, dim_head, c), (0, 2, 1))
    wo_t = jnp.transpose(w_out.reshape(dim, heads, dim_head), (1, 2, 0))     # (h, d, dim)
    bo = b_out.reshape(1, dim)

    kernel = functools.partial(_flash_attn_kernel, n_valid=n, tkv=tkv,
                               need_mask=(n_pad != n), bf16_exp=bf16_exp)

    flops = int(bsz * (4 * heads * dim_head * n_pad * n_pad
                       + 2 * (3 * hidden) * c * n_pad
                       + 2 * dim * hidden * n_pad))
    transcendentals = int(bsz * heads * n_pad * n_pad)
    bytes_accessed = int(2 * bsz * c * n_pad * 4
                         + (w_qkv.size + w_out.size + b_out.size) * 4
                         + bsz * n_pad * dim * 4)

    grid = (bsz, n_pad // tq, heads, n_pad // tkv)

    out_tm = pl.pallas_call(
        kernel,
        out_shape=jax.ShapeDtypeStruct((bsz, n_pad, dim), x.dtype),
        grid_spec=pltpu.PrefetchScalarGridSpec(
            num_scalar_prefetch=0,
            grid=grid,
            in_specs=[
                pl.BlockSpec((1, tq, c), lambda bi, qi, hi, ki: (bi, qi, 0)),     # x (q tile)
                pl.BlockSpec((1, tkv, c), lambda bi, qi, hi, ki: (bi, ki, 0)),    # x (kv, V)
                pl.BlockSpec((1, c, tkv), lambda bi, qi, hi, ki: (bi, 0, ki)),    # x (kv, K)
                pl.BlockSpec((1, c, dim_head), lambda bi, qi, hi, ki: (hi, 0, 0)),   # Wq^T
                pl.BlockSpec((1, dim_head, c), lambda bi, qi, hi, ki: (hi, 0, 0)),   # Wk
                pl.BlockSpec((1, c, dim_head), lambda bi, qi, hi, ki: (hi, 0, 0)),   # Wv^T
                pl.BlockSpec((1, dim_head, dim), lambda bi, qi, hi, ki: (hi, 0, 0)), # Wout^T
                pl.BlockSpec((1, dim), lambda bi, qi, hi, ki: (0, 0)),               # bias
            ],
            out_specs=pl.BlockSpec((1, tq, dim), lambda bi, qi, hi, ki: (bi, qi, 0)),
            scratch_shapes=[
                pltpu.VMEM((tq, dim_head), jnp.bfloat16),   # q tile (projected once/head)
                pltpu.VMEM((tq, 1), jnp.float32),           # running max m
                pltpu.VMEM((tq, 1), jnp.float32),           # running sum l
                pltpu.VMEM((tq, dim_head), jnp.float32),    # output accumulator
            ]),
        compiler_params=pltpu.CompilerParams(
            # batch & q-tiles are parallel (>=2 steps keeps both v7x TensorCores busy);
            # heads / kv carry accumulator state, so they must be arbitrary.
            dimension_semantics=("parallel", "parallel", "arbitrary", "arbitrary"),
            vmem_limit_bytes=32 * 1024 * 1024),
        cost_estimate=pl.CostEstimate(flops=flops,
                                      transcendentals=transcendentals,
                                      bytes_accessed=bytes_accessed),
    )(x_tm, x_tm, x_cm, wq_t, wk, wv_t, wo_t, bo)

    y = jnp.transpose(out_tm, (0, 2, 1))        # (b, dim, n_pad) -> NCW like the module
    return y[:, :, :n] if n_pad != n else y


def attention_forward(x, w_qkv, w_out, b_out, *, heads, dim_head, bf16_exp=None):
    """x: (b, dim, n) f32 (PyTorch NCW). Returns (b, dim, n)."""
    if bf16_exp is None:
        bf16_exp = _bf16_eup_supported()
    try:
        return _forward(x, w_qkv, w_out, b_out,
                        heads=heads, dim_head=dim_head, bf16_exp=bf16_exp)
    except Exception:
        if not bf16_exp:
            raise
        # Fall back to the f32-exp path if the bf16 EUP path fails to lower on this chip.
        return _forward(x, w_qkv, w_out, b_out,
                        heads=heads, dim_head=dim_head, bf16_exp=False)


if __name__ == "__main__":
    # Module hyperparameters: Attention(dim=4, heads=4, dim_head=32)
    dim, heads, dim_head = 4, 4, 32
    hidden = heads * dim_head

    key = jax.random.PRNGKey(0)
    k_x1, k_x2, k_wqkv, k_wout, k_bout = jax.random.split(key, 5)

    # Parameters (conv kernels squeezed over the size-1 spatial axis):
    #   to_qkv.weight: (hidden*3, dim, 1) -> (hidden*3, dim)
    #   to_out.weight: (dim, hidden, 1)   -> (dim, hidden);  to_out.bias: (dim,)
    w_qkv = 0.05 * jax.random.normal(k_wqkv, (3 * hidden, dim), dtype=jnp.float32)
    w_out = 0.05 * jax.random.normal(k_wout, (dim, hidden), dtype=jnp.float32)
    b_out = 0.01 * jax.random.normal(k_bout, (dim,), dtype=jnp.float32)

    def ref(x):
        b, c, n = x.shape
        scale = dim_head ** (-0.5)
        qkv = jnp.einsum('oc,bcn->bon', w_qkv, x)
        q, k, v = jnp.split(qkv, 3, axis=1)
        rh = lambda t: t.reshape(b, heads, dim_head, n)      # 'b (h c) n -> b h c n'
        q, k, v = rh(q) * scale, rh(k), rh(v)
        sim = jnp.einsum('bhdi,bhdj->bhij', q, k)
        attn = jax.nn.softmax(sim, axis=-1)
        o = jnp.einsum('bhij,bhdj->bhid', attn, v)
        o = jnp.transpose(o, (0, 1, 3, 2)).reshape(b, hidden, n)   # 'b h n d -> b (h d) n'
        return jnp.einsum('oc,bcn->bon', w_out, o) + b_out[None, :, None]

    # Small case matching the module's toy shapes (single tile, padded/masked to 128).
    x1 = jax.random.normal(k_x1, (2, dim, 16), dtype=jnp.float32)
    out1 = jax.block_until_ready(
        attention_forward(x1, w_qkv, w_out, b_out, heads=heads, dim_head=dim_head))
    assert out1.shape == (2, dim, 16)
    assert jnp.allclose(out1, ref(x1), atol=2e-2, rtol=2e-2), "mismatch (n=16)"

    # Larger case exercising multiple q/kv tiles + kv padding mask (n=384, tile=256).
    x2 = jax.random.normal(k_x2, (2, dim, 384), dtype=jnp.float32)
    out2 = jax.block_until_ready(
        attention_forward(x2, w_qkv, w_out, b_out, heads=heads, dim_head=dim_head))
    assert out2.shape == (2, dim, 384)
    assert jnp.allclose(out2, ref(x2), atol=2e-2, rtol=2e-2), "mismatch (n=384)"

    print("KERNEL_OK")
</pallas_src>

<mosaic_0001>
module attributes {stable_mosaic.version = 11 : i64} {
  func.func @_flash_attn_kernel(%arg0: i32, %arg1: i32, %arg2: i32, %arg3: i32, %arg4: memref<1x128x4xf32, #tpu.memory_space<vmem>>, %arg5: memref<1x128x4xf32, #tpu.memory_space<vmem>>, %arg6: memref<1x4x128xf32, #tpu.memory_space<vmem>>, %arg7: memref<1x4x32xf32, #tpu.memory_space<vmem>>, %arg8: memref<1x32x4xf32, #tpu.memory_space<vmem>>, %arg9: memref<1x4x32xf32, #tpu.memory_space<vmem>>, %arg10: memref<1x32x4xf32, #tpu.memory_space<vmem>>, %arg11: memref<1x4xf32, #tpu.memory_space<vmem>>, %arg12: memref<1x128x4xf32, #tpu.memory_space<vmem>>, %arg13: memref<128x32xbf16, #tpu.memory_space<vmem>>, %arg14: memref<128x1xf32, #tpu.memory_space<vmem>>, %arg15: memref<128x1xf32, #tpu.memory_space<vmem>>, %arg16: memref<128x32xf32, #tpu.memory_space<vmem>>) attributes {dimension_semantics = [#tpu.dimension_semantics<parallel>, #tpu.dimension_semantics<parallel>, #tpu.dimension_semantics<arbitrary>, #tpu.dimension_semantics<arbitrary>], iteration_bounds = array<i64: 2, 1, 4, 1>, scalar_prefetch = 0 : i64, scratch_operands = 4 : i64, tpu.core_type = #tpu.core_type<tc>, window_params = [{transform_indices = @transform_0, window_bounds = array<i64: 1, 128, 4>}, {transform_indices = @transform_1, window_bounds = array<i64: 1, 128, 4>}, {transform_indices = @transform_2, window_bounds = array<i64: 1, 4, 128>}, {transform_indices = @transform_3, window_bounds = array<i64: 1, 4, 32>}, {transform_indices = @transform_4, window_bounds = array<i64: 1, 32, 4>}, {transform_indices = @transform_5, window_bounds = array<i64: 1, 4, 32>}, {transform_indices = @transform_6, window_bounds = array<i64: 1, 32, 4>}, {pipeline_mode = #tpu.pipeline_mode<synchronous>, transform_indices = @transform_7, window_bounds = array<i64: 1, 4>}, {transform_indices = @transform_8, window_bounds = array<i64: 1, 128, 4>}]} {
    %c0_i32 = arith.constant 0 : i32
    %0 = arith.cmpi eq, %arg3, %c0_i32 : i32
    %1 = arith.extui %0 : i1 to i32
    %c0_i32_0 = arith.constant 0 : i32
    %2 = arith.cmpi ne, %1, %c0_i32_0 : i32
    scf.if %2 {
      %c0_34 = arith.constant 0 : index
      %c0_35 = arith.constant 0 : index
      %c0_36 = arith.constant 0 : index
      %51 = vector.load %arg4[%c0_34, %c0_35, %c0_36] : memref<1x128x4xf32, #tpu.memory_space<vmem>>, vector<1x128x4xf32>
      %52 = vector.shape_cast %51 : vector<1x128x4xf32> to vector<128x4xf32>
      %c0_37 = arith.constant 0 : index
      %c0_38 = arith.constant 0 : index
      %c0_39 = arith.constant 0 : index
      %53 = vector.load %arg7[%c0_37, %c0_38, %c0_39] : memref<1x4x32xf32, #tpu.memory_space<vmem>>, vector<1x4x32xf32>
      %54 = vector.shape_cast %53 : vector<1x4x32xf32> to vector<4x32xf32>
      %cst_40 = arith.constant dense<0.000000e+00> : vector<128x32xf32>
      %55 = tpu.matmul %52, %54, %cst_40 {dimension_numbers = #tpu.dot_dimension_numbers<[1], [0], [0], [1], [0, 0, 1, 1], [], []>} : vector<128x4xf32>, vector<4x32xf32>, vector<128x32xf32> -> vector<128x32xf32>
      %56 = arith.truncf %55 : vector<128x32xf32> to vector<128x32xbf16>
      %c0_41 = arith.constant 0 : index
      %c0_42 = arith.constant 0 : index
      %57 = vector.load %arg13[%c0_41, %c0_42] : memref<128x32xbf16, #tpu.memory_space<vmem>>, vector<128x32xbf16>
      tpu.vector_store %arg13[%c0_41, %c0_42], %56 {strides = array<i32>} : memref<128x32xbf16, #tpu.memory_space<vmem>>, vector<128x32xbf16>,
      %cst_43 = arith.constant 0xFF800000 : f32
      %58 = vector.broadcast %cst_43 : f32 to vector<128x1xf32>
      %c0_44 = arith.constant 0 : index
      %c0_45 = arith.constant 0 : index
      %59 = vector.load %arg14[%c0_44, %c0_45] : memref<128x1xf32, #tpu.memory_space<vmem>>, vector<128x1xf32>
      tpu.vector_store %arg14[%c0_44, %c0_45], %58 {strides = array<i32>} : memref<128x1xf32, #tpu.memory_space<vmem>>, vector<128x1xf32>,
      %cst_46 = arith.constant 0.000000e+00 : f32
      %60 = vector.broadcast %cst_46 : f32 to vector<128x1xf32>
      %c0_47 = arith.constant 0 : index
      %c0_48 = arith.constant 0 : index
      %61 = vector.load %arg15[%c0_47, %c0_48] : memref<128x1xf32, #tpu.memory_space<vmem>>, vector<128x1xf32>
      tpu.vector_store %arg15[%c0_47, %c0_48], %60 {strides = array<i32>} : memref<128x1xf32, #tpu.memory_space<vmem>>, vector<128x1xf32>,
      %cst_49 = arith.constant 0.000000e+00 : f32
      %62 = vector.broadcast %cst_49 : f32 to vector<128x32xf32>
      %c0_50 = arith.constant 0 : index
      %c0_51 = arith.constant 0 : index
      %63 = vector.load %arg16[%c0_50, %c0_51] : memref<128x32xf32, #tpu.memory_space<vmem>>, vector<128x32xf32>
      tpu.vector_store %arg16[%c0_50, %c0_51], %62 {strides = array<i32>} : memref<128x32xf32, #tpu.memory_space<vmem>>, vector<128x32xf32>,
    } else {
    }
    %c0 = arith.constant 0 : index
    %c0_1 = arith.constant 0 : index
    %c0_2 = arith.constant 0 : index
    %3 = vector.load %arg8[%c0, %c0_1, %c0_2] : memref<1x32x4xf32, #tpu.memory_space<vmem>>, vector<1x32x4xf32>
    %4 = vector.shape_cast %3 : vector<1x32x4xf32> to vector<32x4xf32>
    %c0_3 = arith.constant 0 : index
    %c0_4 = arith.constant 0 : index
    %c0_5 = arith.constant 0 : index
    %5 = vector.load %arg6[%c0_3, %c0_4, %c0_5] : memref<1x4x128xf32, #tpu.memory_space<vmem>>, vector<1x4x128xf32>
    %6 = vector.shape_cast %5 : vector<1x4x128xf32> to vector<4x128xf32>
    %cst = arith.constant dense<0.000000e+00> : vector<32x128xf32>
    %7 = tpu.matmul %4, %6, %cst {dimension_numbers = #tpu.dot_dimension_numbers<[1], [0], [0], [1], [0, 0, 1, 1], [], []>} : vector<32x4xf32>, vector<4x128xf32>, vector<32x128xf32> -> vector<32x128xf32>
    %8 = arith.truncf %7 : vector<32x128xf32> to vector<32x128xbf16>
    %c0_6 = arith.constant 0 : index
    %c0_7 = arith.constant 0 : index
    %c0_8 = arith.constant 0 : index
    %9 = vector.load %arg5[%c0_6, %c0_7, %c0_8] : memref<1x128x4xf32, #tpu.memory_space<vmem>>, vector<1x128x4xf32>
    %10 = vector.shape_cast %9 : vector<1x128x4xf32> to vector<128x4xf32>
    %c0_9 = arith.constant 0 : index
    %c0_10 = arith.constant 0 : index
    %c0_11 = arith.constant 0 : index
    %11 = vector.load %arg9[%c0_9, %c0_10, %c0_11] : memref<1x4x32xf32, #tpu.memory_space<vmem>>, vector<1x4x32xf32>
    %12 = vector.shape_cast %11 : vector<1x4x32xf32> to vector<4x32xf32>
    %cst_12 = arith.constant dense<0.000000e+00> : vector<128x32xf32>
    %13 = tpu.matmul %10, %12, %cst_12 {dimension_numbers = #tpu.dot_dimension_numbers<[1], [0], [0], [1], [0, 0, 1, 1], [], []>} : vector<128x4xf32>, vector<4x32xf32>, vector<128x32xf32> -> vector<128x32xf32>
    %14 = arith.truncf %13 : vector<128x32xf32> to vector<128x32xbf16>
    %c0_13 = arith.constant 0 : index
    %c0_14 = arith.constant 0 : index
    %15 = vector.load %arg13[%c0_13, %c0_14] : memref<128x32xbf16, #tpu.memory_space<vmem>>, vector<128x32xbf16>
    %cst_15 = arith.constant dense<0.000000e+00> : vector<128x128xf32>
    %16 = tpu.matmul %15, %8, %cst_15 {dimension_numbers = #tpu.dot_dimension_numbers<[1], [0], [0], [1], [0, 0, 1, 1], [], []>} : vector<128x32xbf16>, vector<32x128xbf16>, vector<128x128xf32> -> vector<128x128xf32>
    %c128_i32 = arith.constant 128 : i32
    %17 = arith.muli %arg3, %c128_i32 : i32
    %18 = tpu.iota {dimensions = array<i32: 1>} : vector<128x128xi32>
    %19 = vector.broadcast %17 : i32 to vector<128x128xi32>
    %20 = arith.addi %19, %18 : vector<128x128xi32>
    %c16_i32 = arith.constant 16 : i32
    %21 = vector.broadcast %c16_i32 : i32 to vector<128x128xi32>
    %22 = arith.cmpi slt, %20, %21 : vector<128x128xi32>
    %cst_16 = arith.constant -1.000000e+30 : f32
    %23 = vector.broadcast %cst_16 : f32 to vector<128x128xf32>
    %24 = arith.select %22, %16, %23 : vector<128x128xi1>, vector<128x128xf32>
    %c0_17 = arith.constant 0 : index
    %c0_18 = arith.constant 0 : index
    %25 = vector.load %arg14[%c0_17, %c0_18] : memref<128x1xf32, #tpu.memory_space<vmem>>, vector<128x1xf32>
    %cst_19 = arith.constant dense<0xFF800000> : vector<128xf32>
    %26 = vector.multi_reduction <maximumf>, %24, %cst_19 [1] : vector<128x128xf32> to vector<128xf32>
    %27 = vector.shape_cast %26 : vector<128xf32> to vector<128x1xf32>
    %28 = arith.maximumf %25, %27 : vector<128x1xf32>
    %29 = arith.subf %25, %28 : vector<128x1xf32>
    %30 = math.exp %29 : vector<128x1xf32>
    %31 = vector.broadcast %28 : vector<128x1xf32> to vector<128x128xf32>
    %32 = arith.subf %24, %31 : vector<128x128xf32>
    %33 = math.exp %32 : vector<128x128xf32>
    %cst_20 = arith.constant dense<0.000000e+00> : vector<128xf32>
    %34 = vector.multi_reduction <add>, %33, %cst_20 [1] : vector<128x128xf32> to vector<128xf32>
    %35 = vector.shape_cast %34 : vector<128xf32> to vector<128x1xf32>
    %36 = arith.truncf %33 : vector<128x128xf32> to vector<128x128xbf16>
    %c0_21 = arith.constant 0 : index
    %c0_22 = arith.constant 0 : index
    %37 = vector.load %arg14[%c0_21, %c0_22] : memref<128x1xf32, #tpu.memory_space<vmem>>, vector<128x1xf32>
    tpu.vector_store %arg14[%c0_21, %c0_22], %28 {strides = array<i32>} : memref<128x1xf32, #tpu.memory_space<vmem>>, vector<128x1xf32>,
    %c0_23 = arith.constant 0 : index
    %c0_24 = arith.constant 0 : index
    %38 = vector.load %arg15[%c0_23, %c0_24] : memref<128x1xf32, #tpu.memory_space<vmem>>, vector<128x1xf32>
    %39 = arith.mulf %30, %38 : vector<128x1xf32>
    %40 = arith.addf %39, %35 : vector<128x1xf32>
    %c0_25 = arith.constant 0 : index
    %c0_26 = arith.constant 0 : index
    %41 = vector.load %arg15[%c0_25, %c0_26] : memref<128x1xf32, #tpu.memory_space<vmem>>, vector<128x1xf32>
    tpu.vector_store %arg15[%c0_25, %c0_26], %40 {strides = array<i32>} : memref<128x1xf32, #tpu.memory_space<vmem>>, vector<128x1xf32>,
    %c0_27 = arith.constant 0 : index
    %c0_28 = arith.constant 0 : index
    %42 = vector.load %arg16[%c0_27, %c0_28] : memref<128x32xf32, #tpu.memory_space<vmem>>, vector<128x32xf32>
    %43 = vector.broadcast %30 : vector<128x1xf32> to vector<128x32xf32>
    %44 = arith.mulf %43, %42 : vector<128x32xf32>
    %cst_29 = arith.constant dense<0.000000e+00> : vector<128x32xf32>
    %45 = tpu.matmul %36, %14, %cst_29 {dimension_numbers = #tpu.dot_dimension_numbers<[1], [0], [0], [1], [0, 0, 1, 1], [], []>} : vector<128x128xbf16>, vector<128x32xbf16>, vector<128x32xf32> -> vector<128x32xf32>
    %46 = arith.addf %44, %45 : vector<128x32xf32>
    %c0_30 = arith.constant 0 : index
    %c0_31 = arith.constant 0 : index
    %47 = vector.load %arg16[%c0_30, %c0_31] : memref<128x32xf32, #tpu.memory_space<vmem>>, vector<128x32xf32>
    tpu.vector_store %arg16[%c0_30, %c0_31], %46 {strides = array<i32>} : memref<128x32xf32, #tpu.memory_space<vmem>>, vector<128x32xf32>,
    %c0_i32_32 = arith.constant 0 : i32
    %48 = arith.cmpi eq, %arg3, %c0_i32_32 : i32
    %49 = arith.extui %48 : i1 to i32
    %c0_i32_33 = arith.constant 0 : i32
    %50 = arith.cmpi ne, %49, %c0_i32_33 : i32
    scf.if %50 {
      %c0_34 = arith.constant 0 : index
      %c0_35 = arith.constant 0 : index
      %51 = vector.load %arg16[%c0_34, %c0_35] : memref<128x32xf32, #tpu.memory_space<vmem>>, vector<128x32xf32>
      %c0_36 = arith.constant 0 : index
      %c0_37 = arith.constant 0 : index
      %52 = vector.load %arg15[%c0_36, %c0_37] : memref<128x1xf32, #tpu.memory_space<vmem>>, vector<128x1xf32>
      %53 = tpu.reciprocal %52 {approx = true} : vector<128x1xf32> -> vector<128x1xf32>
      %54 = vector.broadcast %53 : vector<128x1xf32> to vector<128x32xf32>
      %55 = arith.mulf %51, %54 : vector<128x32xf32>
      %c0_38 = arith.constant 0 : index
      %c0_39 = arith.constant 0 : index
      %c0_40 = arith.constant 0 : index
      %56 = vector.load %arg10[%c0_38, %c0_39, %c0_40] : memref<1x32x4xf32, #tpu.memory_space<vmem>>, vector<1x32x4xf32>
      %57 = vector.shape_cast %56 : vector<1x32x4xf32> to vector<32x4xf32>
      %cst_41 = arith.constant dense<0.000000e+00> : vector<128x4xf32>
      %58 = tpu.matmul %55, %57, %cst_41 {dimension_numbers = #tpu.dot_dimension_numbers<[1], [0], [0], [1], [0, 0, 1, 1], [], []>} : vector<128x32xf32>, vector<32x4xf32>, vector<128x4xf32> -> vector<128x4xf32>
      %c0_i32_42 = arith.constant 0 : i32
      %59 = arith.cmpi eq, %arg2, %c0_i32_42 : i32
      %60 = arith.extui %59 : i1 to i32
      %c0_i32_43 = arith.constant 0 : i32
      %61 = arith.cmpi ne, %60, %c0_i32_43 : i32
      scf.if %61 {
        %c0_46 = arith.constant 0 : index
        %c0_47 = arith.constant 0 : index
        %65 = vector.load %arg11[%c0_46, %c0_47] : memref<1x4xf32, #tpu.memory_space<vmem>>, vector<1x4xf32>
        %66 = vector.broadcast %65 : vector<1x4xf32> to vector<128x4xf32>
        %67 = arith.addf %58, %66 : vector<128x4xf32>
        %c0_48 = arith.constant 0 : index
        %c0_49 = arith.constant 0 : index
        %c0_50 = arith.constant 0 : index
        %68 = vector.load %arg12[%c0_48, %c0_49, %c0_50] : memref<1x128x4xf32, #tpu.memory_space<vmem>>, vector<1x128x4xf32>
        %69 = vector.shape_cast %68 : vector<1x128x4xf32> to vector<128x4xf32>
        %70 = vector.shape_cast %67 : vector<128x4xf32> to vector<1x128x4xf32>
        tpu.vector_store %arg12[%c0_48, %c0_49, %c0_50], %70 {strides = array<i32>} : memref<1x128x4xf32, #tpu.memory_space<vmem>>, vector<1x128x4xf32>,
      } else {
      }
      %c0_i32_44 = arith.constant 0 : i32
      %62 = arith.cmpi ne, %arg2, %c0_i32_44 : i32
      %63 = arith.extui %62 : i1 to i32
      %c0_i32_45 = arith.constant 0 : i32
      %64 = arith.cmpi ne, %63, %c0_i32_45 : i32
      scf.if %64 {
        %c0_46 = arith.constant 0 : index
        %c0_47 = arith.constant 0 : index
        %c0_48 = arith.constant 0 : index
        %65 = vector.load %arg12[%c0_46, %c0_47, %c0_48] : memref<1x128x4xf32, #tpu.memory_space<vmem>>, vector<1x128x4xf32>
        %66 = vector.shape_cast %65 : vector<1x128x4xf32> to vector<128x4xf32>
        %67 = arith.addf %66, %58 : vector<128x4xf32>
        %c0_49 = arith.constant 0 : index
        %c0_50 = arith.constant 0 : index
        %c0_51 = arith.constant 0 : index
        %68 = vector.load %arg12[%c0_49, %c0_50, %c0_51] : memref<1x128x4xf32, #tpu.memory_space<vmem>>, vector<1x128x4xf32>
        %69 = vector.shape_cast %68 : vector<1x128x4xf32> to vector<128x4xf32>
        %70 = vector.shape_cast %67 : vector<128x4xf32> to vector<1x128x4xf32>
        tpu.vector_store %arg12[%c0_49, %c0_50, %c0_51], %70 {strides = array<i32>} : memref<1x128x4xf32, #tpu.memory_space<vmem>>, vector<1x128x4xf32>,
      } else {
      }
    } else {
    }
    return
  }
  func.func @transform_0(%arg0: i32, %arg1: i32, %arg2: i32, %arg3: i32) -> (i32, i32, i32) {
    %c0_i32 = arith.constant 0 : i32
    %c0_i32_0 = arith.constant 0 : i32
    return %arg0, %arg1, %c0_i32 : i32, i32, i32
  }
  func.func @transform_1(%arg0: i32, %arg1: i32, %arg2: i32, %arg3: i32) -> (i32, i32, i32) {
    %c0_i32 = arith.constant 0 : i32
    %c0_i32_0 = arith.constant 0 : i32
    return %arg0, %arg3, %c0_i32 : i32, i32, i32
  }
  func.func @transform_2(%arg0: i32, %arg1: i32, %arg2: i32, %arg3: i32) -> (i32, i32, i32) {
    %c0_i32 = arith.constant 0 : i32
    %c0_i32_0 = arith.constant 0 : i32
    return %arg0, %c0_i32, %arg3 : i32, i32, i32
  }
  func.func @transform_3(%arg0: i32, %arg1: i32, %arg2: i32, %arg3: i32) -> (i32, i32, i32) {
    %c0_i32 = arith.constant 0 : i32
    %c0_i32_0 = arith.constant 0 : i32
    %c0_i32_1 = arith.constant 0 : i32
    return %arg2, %c0_i32, %c0_i32_0 : i32, i32, i32
  }
  func.func @transform_4(%arg0: i32, %arg1: i32, %arg2: i32, %arg3: i32) -> (i32, i32, i32) {
    %c0_i32 = arith.constant 0 : i32
    %c0_i32_0 = arith.constant 0 : i32
    %c0_i32_1 = arith.constant 0 : i32
    return %arg2, %c0_i32, %c0_i32_0 : i32, i32, i32
  }
  func.func @transform_5(%arg0: i32, %arg1: i32, %arg2: i32, %arg3: i32) -> (i32, i32, i32) {
    %c0_i32 = arith.constant 0 : i32
    %c0_i32_0 = arith.constant 0 : i32
    %c0_i32_1 = arith.constant 0 : i32
    return %arg2, %c0_i32, %c0_i32_0 : i32, i32, i32
  }
  func.func @transform_6(%arg0: i32, %arg1: i32, %arg2: i32, %arg3: i32) -> (i32, i32, i32) {
    %c0_i32 = arith.constant 0 : i32
    %c0_i32_0 = arith.constant 0 : i32
    %c0_i32_1 = arith.constant 0 : i32
    return %arg2, %c0_i32, %c0_i32_0 : i32, i32, i32
  }
  func.func @transform_7(%arg0: i32, %arg1: i32, %arg2: i32, %arg3: i32) -> (i32, i32) {
    %c0_i32 = arith.constant 0 : i32
    %c0_i32_0 = arith.constant 0 : i32
    %c0_i32_1 = arith.constant 0 : i32
    return %c0_i32, %c0_i32_0 : i32, i32
  }
  func.func @transform_8(%arg0: i32, %arg1: i32, %arg2: i32, %arg3: i32) -> (i32, i32, i32) {
    %c0_i32 = arith.constant 0 : i32
    %c0_i32_0 = arith.constant 0 : i32
    return %arg0, %arg1, %c0_i32 : i32, i32, i32
  }
}

</mosaic_0001>

<llo_original>
// kernel: tpu_custom_call.1
$region0: #{tpu_custom_call.1}
  #allocation0 [shape = 'u32[]', space=smem, size = 0x4, offset = 0x4, fixed_abs, tag = 'smem constant byte address 0x4 - core index']
  #allocation1 [shape = 'u32[144,128]{1,0:T(1,128)}', space=vmem, size = 0x12000, scoped, tag = 'internal scratch']
  #allocation2 [shape = 'bf16[128,32]{1,0:T(16,128)(2,1)}', space=vmem, size = 0x8000, scoped, tag = 'scratch operand']
  #allocation3 [shape = 'f32[128,1]{1,0:T(8,128)}', space=vmem, size = 0x10000, scoped, tag = 'scratch operand']
  #allocation4 [shape = 'f32[128,1]{1,0:T(8,128)}', space=vmem, size = 0x10000, scoped, tag = 'scratch operand']
  #allocation5 [shape = 'f32[128,32]{1,0:T(8,128)}', space=vmem, size = 0x10000, scoped, tag = 'scratch operand']
  %s0 = inlined_call_operand.vmem [shape: f32[2,128,4], index: 0, kind: input, shape index: {}]
  %s1 = inlined_call_operand.vmem [shape: f32[2,128,4], index: 1, kind: input, shape index: {}]
  %s2 = inlined_call_operand.vmem [shape: f32[2,4,128], index: 2, kind: input, shape index: {}]
  %s3 = inlined_call_operand.vmem [shape: f32[4,4,32], index: 3, kind: input, shape index: {}]
  %s4 = inlined_call_operand.vmem [shape: f32[4,32,4], index: 4, kind: input, shape index: {}]
  %s5 = inlined_call_operand.vmem [shape: f32[4,4,32], index: 5, kind: input, shape index: {}]
  %s6 = inlined_call_operand.vmem [shape: f32[4,32,4], index: 6, kind: input, shape index: {}]
  %s7 = inlined_call_operand.vmem [shape: f32[1,4], index: 7, kind: input, shape index: {}]
  %s8 = inlined_call_operand.vmem [shape: f32[2,128,4], index: 8, kind: output, shape index: {}]
  %s9 = sld [smem:[#allocation0]]
  $region81: #{tpu_custom_call.1} parent=0
    _
  %s11 = ssub.s32 1, %s9
  %s12 = scalar_select 0, %s11, %s9
  loop: start=0, step=1, limit=10
  $region2: #{tpu_custom_call.1} parent=0 // loop_pre_header
    _
  $region3: #{tpu_custom_call.1} parent=0 // loop_header
    %s14 = sphi 0, %s18
    %p15 = scmp.ge.s32.totalorder %s14, 10
    %s21 = sphi 0, %s47
    %s22 = sphi 0, %s43
    %s23 = sphi 0, %s39
    %s24 = sphi 0, %s35
    %s25 = sphi 0, %s21
    %s26 = sphi 0, %s22
    %s27 = sphi 0, %s23
    %s28 = sphi 0, %s24
    %s29 = sphi 0, %s25
    %s30 = sphi 0, %s26
    %s31 = sphi 0, %s27
    %s32 = sphi 0, %s28
    %s52 = sphi 0, %s54
    %s55 = sphi 0, %s52
    %s56 = sphi 0, %s55
    %s72 = sphi 0, %s56
    %s80 = sphi 0, %s82
    %s83 = sphi 0, %s80
    %s84 = sphi 0, %s83
    %s100 = sphi 0, %s84
    %s108 = sphi 0, %s110
    %s111 = sphi 0, %s108
    %s112 = sphi 0, %s111
    %s128 = sphi 0, %s112
    %s134 = sphi 0, %s136
    %s137 = sphi 0, %s134
    %s138 = sphi 0, %s137
    %s154 = sphi 0, %s138
    %s160 = sphi 0, %s162
    %s163 = sphi 0, %s160
    %s164 = sphi 0, %s163
    %s180 = sphi 0, %s164
    %s186 = sphi 0, %s188
    %s189 = sphi 0, %s186
    %s190 = sphi 0, %s189
    %s206 = sphi 0, %s190
    %s212 = sphi 0, %s214
    %s215 = sphi 0, %s212
    %s216 = sphi 0, %s215
    %s232 = sphi 0, %s216
    %s236 = sphi 0, %s236
    %s238 = sphi 0, %s236
    %s239 = sphi 0, %s238
    %s253 = sphi 0, %s239
    %s261 = sphi 0, %s263
    %s264 = sphi 0, %s261
    %s265 = sphi 0, %s264
    %s281 = sphi 0, %s265
  $region4: #{tpu_custom_call.1} parent=0 // loop_header_branch
    %17 = sbr.rel (%p15) target = $region8
  $region5: #{tpu_custom_call.1} parent=0 // loop_body
    %s19 = ssub.s32 %s14, 1
    %s20 = ssub.s32 %s14, 2
    %s33 = sadd.s32 1, %s24
    %p34 = scmp.ge.s32.totalorder %s33, 1
    %s35 = scalar_select %p34, 0, %s33
    %s36 = sadd.s32 1, %s23
    %s37 = scalar_select %p34, %s36, %s23
    %p38 = scmp.ge.s32.totalorder %s37, 4
    %s39 = scalar_select %p38, 0, %s37
    %s40 = sadd.s32 1, %s22
    %s41 = scalar_select %p38, %s40, %s22
    %p42 = scmp.ge.s32.totalorder %s41, 1
    %s43 = scalar_select %p42, 0, %s41
    %s44 = sadd.s32 1, %s21
    %s45 = scalar_select %p42, %s44, %s21
    %p46 = scmp.ge.s32.totalorder %s45, 2
    %s47 = scalar_select %p46, 0, %s45
    %s48 = ssub.s32 %s21, %s47
    %s49 = ssub.s32 %s22, %s43
    %s50 = sor.u32 %s48, %s49
    %p51 = scmp.eq.s32.totalorder %s50, 0
    %s53 = sadd.s32 %s52, 1
    %s54 = scalar_select %p51, %s52, %s53
    %p57 = pneg %p51
    %p58 = scmp.eq.s32.totalorder %s14, 7
    %p59 = por %p57, %p58
    %p60 = scmp.ne.s32.totalorder %s52, %s55
    %p61 = scmp.eq.s32.totalorder %s14, 0
    %p62 = por %p60, %p61
    %p63 = scmp.ne.s32.totalorder %s52, %s55
    %p64 = scmp.eq.s32.totalorder %s19, 7
    %p65 = por %p63, %p64
    %p66 = scmp.ne.s32.totalorder %s55, %s56
    %p67 = scmp.eq.s32.totalorder %s19, 0
    %p68 = por %p66, %p67
    %p69 = scmp.ne.s32.totalorder %s55, %s56
    %p70 = scmp.eq.s32.totalorder %s20, 7
    %p71 = por %p69, %p70
    %p73 = scmp.ne.s32.totalorder %s56, %s72
    %p74 = scmp.eq.s32.totalorder %s20, 0
    %p75 = por %p73, %p74
    %s76 = ssub.s32 %s21, %s47
    %s77 = ssub.s32 %s24, %s35
    %s78 = sor.u32 %s76, %s77
    %p79 = scmp.eq.s32.totalorder %s78, 0
    %s81 = sadd.s32 %s80, 1
    %s82 = scalar_select %p79, %s80, %s81
    %p85 = pneg %p79
    %p86 = scmp.eq.s32.totalorder %s14, 7
    %p87 = por %p85, %p86
    %p88 = scmp.ne.s32.totalorder %s80, %s83
    %p89 = scmp.eq.s32.totalorder %s14, 0
    %p90 = por %p88, %p89
    %p91 = scmp.ne.s32.totalorder %s80, %s83
    %p92 = scmp.eq.s32.totalorder %s19, 7
    %p93 = por %p91, %p92
    %p94 = scmp.ne.s32.totalorder %s83, %s84
    %p95 = scmp.eq.s32.totalorder %s19, 0
    %p96 = por %p94, %p95
    %p97 = scmp.ne.s32.totalorder %s83, %s84
    %p98 = scmp.eq.s32.totalorder %s20, 7
    %p99 = por %p97, %p98
    %p101 = scmp.ne.s32.totalorder %s84, %s100
    %p102 = scmp.eq.s32.totalorder %s20, 0
    %p103 = por %p101, %p102
    %s104 = ssub.s32 %s21, %s47
    %s105 = ssub.s32 %s24, %s35
    %s106 = sor.u32 %s104, %s105
    %p107 = scmp.eq.s32.totalorder %s106, 0
    %s109 = sadd.s32 %s108, 1
    %s110 = scalar_select %p107, %s108, %s109
    %p113 = pneg %p107
    %p114 = scmp.eq.s32.totalorder %s14, 7
    %p115 = por %p113, %p114
    %p116 = scmp.ne.s32.totalorder %s108, %s111
    %p117 = scmp.eq.s32.totalorder %s14, 0
    %p118 = por %p116, %p117
    %p119 = scmp.ne.s32.totalorder %s108, %s111
    %p120 = scmp.eq.s32.totalorder %s19, 7
    %p121 = por %p119, %p120
    %p122 = scmp.ne.s32.totalorder %s111, %s112
    %p123 = scmp.eq.s32.totalorder %s19, 0
    %p124 = por %p122, %p123
    %p125 = scmp.ne.s32.totalorder %s111, %s112
    %p126 = scmp.eq.s32.totalorder %s20, 7
    %p127 = por %p125, %p126
    %p129 = scmp.ne.s32.totalorder %s112, %s128
    %p130 = scmp.eq.s32.totalorder %s20, 0
    %p131 = por %p129, %p130
    %s132 = ssub.s32 %s23, %s39
    %p133 = scmp.eq.s32.totalorder %s132, 0
    %s135 = sadd.s32 %s134, 1
    %s136 = scalar_select %p133, %s134, %s135
    %p139 = pneg %p133
    %p140 = scmp.eq.s32.totalorder %s14, 7
    %p141 = por %p139, %p140
    %p142 = scmp.ne.s32.totalorder %s134, %s137
    %p143 = scmp.eq.s32.totalorder %s14, 0
    %p144 = por %p142, %p143
    %p145 = scmp.ne.s32.totalorder %s134, %s137
    %p146 = scmp.eq.s32.totalorder %s19, 7
    %p147 = por %p145, %p146
    %p148 = scmp.ne.s32.totalorder %s137, %s138
    %p149 = scmp.eq.s32.totalorder %s19, 0
    %p150 = por %p148, %p149
    %p151 = scmp.ne.s32.totalorder %s137, %s138
    %p152 = scmp.eq.s32.totalorder %s20, 7
    %p153 = por %p151, %p152
    %p155 = scmp.ne.s32.totalorder %s138, %s154
    %p156 = scmp.eq.s32.totalorder %s20, 0
    %p157 = por %p155, %p156
    %s158 = ssub.s32 %s23, %s39
    %p159 = scmp.eq.s32.totalorder %s158, 0
    %s161 = sadd.s32 %s160, 1
    %s162 = scalar_select %p159, %s160, %s161
    %p165 = pneg %p159
    %p166 = scmp.eq.s32.totalorder %s14, 7
    %p167 = por %p165, %p166
    %p168 = scmp.ne.s32.totalorder %s160, %s163
    %p169 = scmp.eq.s32.totalorder %s14, 0
    %p170 = por %p168, %p169
    %p171 = scmp.ne.s32.totalorder %s160, %s163
    %p172 = scmp.eq.s32.totalorder %s19, 7
    %p173 = por %p171, %p172
    %p174 = scmp.ne.s32.totalorder %s163, %s164
    %p175 = scmp.eq.s32.totalorder %s19, 0
    %p176 = por %p174, %p175
    %p177 = scmp.ne.s32.totalorder %s163, %s164
    %p178 = scmp.eq.s32.totalorder %s20, 7
    %p179 = por %p177, %p178
    %p181 = scmp.ne.s32.totalorder %s164, %s180
    %p182 = scmp.eq.s32.totalorder %s20, 0
    %p183 = por %p181, %p182
    %s184 = ssub.s32 %s23, %s39
    %p185 = scmp.eq.s32.totalorder %s184, 0
    %s187 = sadd.s32 %s186, 1
    %s188 = scalar_select %p185, %s186, %s187
    %p191 = pneg %p185
    %p192 = scmp.eq.s32.totalorder %s14, 7
    %p193 = por %p191, %p192
    %p194 = scmp.ne.s32.totalorder %s186, %s189
    %p195 = scmp.eq.s32.totalorder %s14, 0
    %p196 = por %p194, %p195
    %p197 = scmp.ne.s32.totalorder %s186, %s189
    %p198 = scmp.eq.s32.totalorder %s19, 7
    %p199 = por %p197, %p198
    %p200 = scmp.ne.s32.totalorder %s189, %s190
    %p201 = scmp.eq.s32.totalorder %s19, 0
    %p202 = por %p200, %p201
    %p203 = scmp.ne.s32.totalorder %s189, %s190
    %p204 = scmp.eq.s32.totalorder %s20, 7
    %p205 = por %p203, %p204
    %p207 = scmp.ne.s32.totalorder %s190, %s206
    %p208 = scmp.eq.s32.totalorder %s20, 0
    %p209 = por %p207, %p208
    %s210 = ssub.s32 %s23, %s39
    %p211 = scmp.eq.s32.totalorder %s210, 0
    %s213 = sadd.s32 %s212, 1
    %s214 = scalar_select %p211, %s212, %s213
    %p217 = pneg %p211
    %p218 = scmp.eq.s32.totalorder %s14, 7
    %p219 = por %p217, %p218
    %p220 = scmp.ne.s32.totalorder %s212, %s215
    %p221 = scmp.eq.s32.totalorder %s14, 0
    %p222 = por %p220, %p221
    %p223 = scmp.ne.s32.totalorder %s212, %s215
    %p224 = scmp.eq.s32.totalorder %s19, 7
    %p225 = por %p223, %p224
    %p226 = scmp.ne.s32.totalorder %s215, %s216
    %p227 = scmp.eq.s32.totalorder %s19, 0
    %p228 = por %p226, %p227
    %p229 = scmp.ne.s32.totalorder %s215, %s216
    %p230 = scmp.eq.s32.totalorder %s20, 7
    %p231 = por %p229, %p230
    %p233 = scmp.ne.s32.totalorder %s216, %s232
    %p234 = scmp.eq.s32.totalorder %s20, 0
    %p235 = por %p233, %p234
    %s237 = sadd.s32 %s236, 1
    %p240 = scmp.eq.s32.totalorder %s14, 7
    %p241 = scmp.ne.s32.totalorder %s236, %s238
    %p242 = scmp.eq.s32.totalorder %s14, 0
    %p243 = por %p241, %p242
    %p244 = scmp.ne.s32.totalorder %s236, %s238
    %p245 = scmp.eq.s32.totalorder %s19, 7
    %p246 = por %p244, %p245
    %p247 = scmp.ne.s32.totalorder %s238, %s239
    %p248 = scmp.eq.s32.totalorder %s19, 0
    %p249 = por %p247, %p248
    %p250 = scmp.ne.s32.totalorder %s238, %s239
    %p251 = scmp.eq.s32.totalorder %s20, 7
    %p252 = por %p250, %p251
    %p254 = scmp.ne.s32.totalorder %s239, %s253
    %p255 = scmp.eq.s32.totalorder %s20, 0
    %p256 = por %p254, %p255
    %s257 = ssub.s32 %s21, %s47
    %s258 = ssub.s32 %s22, %s43
    %s259 = sor.u32 %s257, %s258
    %p260 = scmp.eq.s32.totalorder %s259, 0
    %s262 = sadd.s32 %s261, 1
    %s263 = scalar_select %p260, %s261, %s262
    %p266 = pneg %p260
    %p267 = scmp.eq.s32.totalorder %s14, 7
    %p268 = por %p266, %p267
    %p269 = scmp.ne.s32.totalorder %s261, %s264
    %p270 = scmp.eq.s32.totalorder %s14, 0
    %p271 = por %p269, %p270
    %p272 = scmp.ne.s32.totalorder %s261, %s264
    %p273 = scmp.eq.s32.totalorder %s19, 7
    %p274 = por %p272, %p273
    %p275 = scmp.ne.s32.totalorder %s264, %s265
    %p276 = scmp.eq.s32.totalorder %s19, 0
    %p277 = por %p275, %p276
    %p278 = scmp.ne.s32.totalorder %s264, %s265
    %p279 = scmp.eq.s32.totalorder %s20, 7
    %p280 = por %p278, %p279
    %p282 = scmp.ne.s32.totalorder %s265, %s281
    %p283 = scmp.eq.s32.totalorder %s20, 0
    %p284 = por %p282, %p283
    %p285 = scmp.le.s32.totalorder 1, %s14
    %p286 = scmp.lt.s32.totalorder %s14, 9
    %p287 = pnand %p285, %p286
    %p288 = pneg %p287
    // Predicated region
    $region9: #{tpu_custom_call.1} parent=5 // pred_check
      _
    $region10: #{tpu_custom_call.1} parent=5 // pred_check_branch
      %290 = sbr.rel (%p287) target = $region12
    $region11: #{tpu_custom_call.1} parent=5 // pred_region
      %s291 = ssub.s32 %s14, 1
      // Predicated region
      $region13: #{tpu_custom_call.1} parent=11 // pred_check
        %p292 = pneg %p249
      $region14: #{tpu_custom_call.1} parent=11 // pred_check_branch
        %294 = sbr.rel (%p292) target = $region16
      $region15: #{tpu_custom_call.1} parent=11 // pred_region
        _
      $region16: #{tpu_custom_call.1} parent=11 // pred_fallthru
        _
    $region12: #{tpu_custom_call.1} parent=5 // pred_fallthru
      _
    %p295 = scmp.lt.s32.totalorder %s14, 8
    // Predicated region
    $region17: #{tpu_custom_call.1} parent=5 // pred_check
      %p296 = pneg %p295
    $region18: #{tpu_custom_call.1} parent=5 // pred_check_branch
      %298 = sbr.rel (%p296) target = $region20
    $region19: #{tpu_custom_call.1} parent=5 // pred_region
      // Predicated region
      $region21: #{tpu_custom_call.1} parent=19 // pred_check
        %p299 = pneg %p62
      $region22: #{tpu_custom_call.1} parent=19 // pred_check_branch
        %301 = sbr.rel (%p299) target = $region24
      $region23: #{tpu_custom_call.1} parent=19 // pred_region
        %s302 = smul.u32 16, %s22
        %p303 = scmp.lt.s32.totalorder %s21, 1
        %s304 = scalar_select %p303, %s21, 1
        %p305 = scmp.lt.s32.totalorder %s302, 15
        %s306 = scalar_select %p305, %s302, 15
        %s307 = smul.addr %s304, 16
        %s308 = sadd.s32 %s306, %s307
        %s309 = smul.addr %s308, 8
        %s310 = scalar_lea.vmem %s0, %s309
        %s311 = smul.u32 16, %s22
      $region24: #{tpu_custom_call.1} parent=19 // pred_fallthru
        _
      // Predicated region
      $region25: #{tpu_custom_call.1} parent=19 // pred_check
        %p312 = pneg %p90
      $region26: #{tpu_custom_call.1} parent=19 // pred_check_branch
        %314 = sbr.rel (%p312) target = $region28
      $region27: #{tpu_custom_call.1} parent=19 // pred_region
        %s315 = smul.u32 16, %s24
        %p316 = scmp.lt.s32.totalorder %s21, 1
        %s317 = scalar_select %p316, %s21, 1
        %p318 = scmp.lt.s32.totalorder %s315, 15
        %s319 = scalar_select %p318, %s315, 15
        %s320 = smul.addr %s317, 16
        %s321 = sadd.s32 %s319, %s320
        %s322 = smul.addr %s321, 8
        %s323 = scalar_lea.vmem %s1, %s322
        %s324 = smul.u32 16, %s24
      $region28: #{tpu_custom_call.1} parent=19 // pred_fallthru
        _
      // Predicated region
      $region29: #{tpu_custom_call.1} parent=19 // pred_check
        %p325 = pneg %p118
      $region30: #{tpu_custom_call.1} parent=19 // pred_check_branch
        %327 = sbr.rel (%p325) target = $region32
      $region31: #{tpu_custom_call.1} parent=19 // pred_region
        %p328 = scmp.lt.s32.totalorder %s21, 1
        %s329 = scalar_select %p328, %s21, 1
        %p330 = scmp.lt.s32.totalorder %s24, 0
        %s331 = scalar_select %p330, %s24, 0
        %s332 = sadd.s32 %s331, %s329
        %s333 = smul.addr %s332, 4
        %s334 = scalar_lea.vmem %s2, %s333
      $region32: #{tpu_custom_call.1} parent=19 // pred_fallthru
        _
      // Predicated region
      $region33: #{tpu_custom_call.1} parent=19 // pred_check
        %p335 = pneg %p144
      $region34: #{tpu_custom_call.1} parent=19 // pred_check_branch
        %337 = sbr.rel (%p335) target = $region36
      $region35: #{tpu_custom_call.1} parent=19 // pred_region
        %p338 = scmp.lt.s32.totalorder %s23, 3
        %s339 = scalar_select %p338, %s23, 3
        %s340 = smul.addr %s339, 4
        %s341 = scalar_lea.vmem %s3, %s340
      $region36: #{tpu_custom_call.1} parent=19 // pred_fallthru
        _
      // Predicated region
      $region37: #{tpu_custom_call.1} parent=19 // pred_check
        %p342 = pneg %p170
      $region38: #{tpu_custom_call.1} parent=19 // pred_check_branch
        %344 = sbr.rel (%p342) target = $region40
      $region39: #{tpu_custom_call.1} parent=19 // pred_region
        %p345 = scmp.lt.s32.totalorder %s23, 3
        %s346 = scalar_select %p345, %s23, 3
        %s347 = smul.addr %s346, 4
        %s348 = smul.addr %s347, 8
        %s349 = scalar_lea.vmem %s4, %s348
      $region40: #{tpu_custom_call.1} parent=19 // pred_fallthru
        _
      // Predicated region
      $region41: #{tpu_custom_call.1} parent=19 // pred_check
        %p350 = pneg %p196
      $region42: #{tpu_custom_call.1} parent=19 // pred_check_branch
        %352 = sbr.rel (%p350) target = $region44
      $region43: #{tpu_custom_call.1} parent=19 // pred_region
        %p353 = scmp.lt.s32.totalorder %s23, 3
        %s354 = scalar_select %p353, %s23, 3
        %s355 = smul.addr %s354, 4
        %s356 = scalar_lea.vmem %s5, %s355
      $region44: #{tpu_custom_call.1} parent=19 // pred_fallthru
        _
      // Predicated region
      $region45: #{tpu_custom_call.1} parent=19 // pred_check
        %p357 = pneg %p222
      $region46: #{tpu_custom_call.1} parent=19 // pred_check_branch
        %359 = sbr.rel (%p357) target = $region48
      $region47: #{tpu_custom_call.1} parent=19 // pred_region
        %p360 = scmp.lt.s32.totalorder %s23, 3
        %s361 = scalar_select %p360, %s23, 3
        %s362 = smul.addr %s361, 4
        %s363 = smul.addr %s362, 8
        %s364 = scalar_lea.vmem %s6, %s363
      $region48: #{tpu_custom_call.1} parent=19 // pred_fallthru
        _
    $region20: #{tpu_custom_call.1} parent=5 // pred_fallthru
      _
    %p365 = scmp.le.s32.totalorder 1, %s14
    %p366 = scmp.lt.s32.totalorder %s14, 9
    %p367 = pnand %p365, %p366
    %p368 = pneg %p367
    // Predicated region
    $region49: #{tpu_custom_call.1} parent=5 // pred_check
      _
    $region50: #{tpu_custom_call.1} parent=5 // pred_check_branch
      %370 = sbr.rel (%p367) target = $region52
    $region51: #{tpu_custom_call.1} parent=5 // pred_region
      %s371 = ssub.s32 %s14, 1
      %s372 = smul.u32 16, %s26
      %p373 = scmp.lt.s32.totalorder %s25, 1
      %s374 = scalar_select %p373, %s25, 1
      %p375 = scmp.lt.s32.totalorder %s372, 15
      %s376 = scalar_select %p375, %s372, 15
      %s377 = smul.addr %s374, 16
      %s378 = sadd.s32 %s376, %s377
      %s379 = smul.addr %s378, 8
      %s380 = scalar_lea.vmem %s0, %s379
      %p381 = pneg %p68
      %p382 = pneg %p65
      %s383 = smul.u32 16, %s28
      %p384 = scmp.lt.s32.totalorder %s25, 1
      %s385 = scalar_select %p384, %s25, 1
      %p386 = scmp.lt.s32.totalorder %s383, 15
      %s387 = scalar_select %p386, %s383, 15
      %s388 = smul.addr %s385, 16
      %s389 = sadd.s32 %s387, %s388
      %s390 = smul.addr %s389, 8
      %s391 = scalar_lea.vmem %s1, %s390
      %p392 = pneg %p96
      %p393 = pneg %p93
      %p394 = scmp.lt.s32.totalorder %s25, 1
      %s395 = scalar_select %p394, %s25, 1
      %p396 = scmp.lt.s32.totalorder %s28, 0
      %s397 = scalar_select %p396, %s28, 0
      %s398 = sadd.s32 %s397, %s395
      %s399 = smul.addr %s398, 4
      %s400 = scalar_lea.vmem %s2, %s399
      %p401 = pneg %p124
      %p402 = pneg %p121
      %p403 = scmp.lt.s32.totalorder %s27, 3
      %s404 = scalar_select %p403, %s27, 3
      %s405 = smul.addr %s404, 4
      %s406 = scalar_lea.vmem %s3, %s405
      %p407 = pneg %p150
      %p408 = pneg %p147
      %p409 = scmp.lt.s32.totalorder %s27, 3
      %s410 = scalar_select %p409, %s27, 3
      %s411 = smul.addr %s410, 4
      %s412 = smul.addr %s411, 8
      %s413 = scalar_lea.vmem %s4, %s412
      %p414 = pneg %p176
      %p415 = pneg %p173
      %p416 = scmp.lt.s32.totalorder %s27, 3
      %s417 = scalar_select %p416, %s27, 3
      %s418 = smul.addr %s417, 4
      %s419 = scalar_lea.vmem %s5, %s418
      %p420 = pneg %p202
      %p421 = pneg %p199
      %p422 = scmp.lt.s32.totalorder %s27, 3
      %s423 = scalar_select %p422, %s27, 3
      %s424 = smul.addr %s423, 4
      %s425 = smul.addr %s424, 8
      %s426 = scalar_lea.vmem %s6, %s425
      %p427 = pneg %p228
      %p428 = pneg %p225
      %p429 = pneg %p249
      %p430 = pneg %p246
      %p431 = pneg %p277
      %p432 = pneg %p274
      %s433 = smul.u32 16, %s26
      %p434 = scmp.lt.s32.totalorder %s25, 1
      %s435 = scalar_select %p434, %s25, 1
      %p436 = scmp.lt.s32.totalorder %s433, 15
      %s437 = scalar_select %p436, %s433, 15
      %s438 = smul.addr %s435, 16
      %s439 = sadd.s32 %s437, %s438
      %s440 = smul.addr %s439, 8
      %s441 = scalar_lea.vmem %s8, %s440
      %s442 = smul.u32 16, %s26
      %p443 = scmp.lt.s32.totalorder %s25, 1
      %s444 = scalar_select %p443, %s25, 1
      %p445 = scmp.lt.s32.totalorder %s442, 15
      %s446 = scalar_select %p445, %s442, 15
      %s447 = smul.addr %s444, 16
      %s448 = sadd.s32 %s446, %s447
      %s449 = smul.addr %s448, 8
      %s450 = scalar_lea.vmem %s0, %s449
      %s451 = smul.u32 16, %s26
      %s452 = smul.u32 16, %s28
      %p453 = scmp.lt.s32.totalorder %s25, 1
      %s454 = scalar_select %p453, %s25, 1
      %p455 = scmp.lt.s32.totalorder %s452, 15
      %s456 = scalar_select %p455, %s452, 15
      %s457 = smul.addr %s454, 16
      %s458 = sadd.s32 %s456, %s457
      %s459 = smul.addr %s458, 8
      %s460 = scalar_lea.vmem %s1, %s459
      %s461 = smul.u32 16, %s28
      %p462 = scmp.lt.s32.totalorder %s25, 1
      %s463 = scalar_select %p462, %s25, 1
      %p464 = scmp.lt.s32.totalorder %s28, 0
      %s465 = scalar_select %p464, %s28, 0
      %s466 = sadd.s32 %s465, %s463
      %s467 = smul.addr %s466, 4
      %s468 = scalar_lea.vmem %s2, %s467
      %p469 = scmp.lt.s32.totalorder %s27, 3
      %s470 = scalar_select %p469, %s27, 3
      %s471 = smul.addr %s470, 4
      %s472 = scalar_lea.vmem %s3, %s471
      %p473 = scmp.lt.s32.totalorder %s27, 3
      %s474 = scalar_select %p473, %s27, 3
      %s475 = smul.addr %s474, 4
      %s476 = smul.addr %s475, 8
      %s477 = scalar_lea.vmem %s4, %s476
      %p478 = scmp.lt.s32.totalorder %s27, 3
      %s479 = scalar_select %p478, %s27, 3
      %s480 = smul.addr %s479, 4
      %s481 = scalar_lea.vmem %s5, %s480
      %p482 = scmp.lt.s32.totalorder %s27, 3
      %s483 = scalar_select %p482, %s27, 3
      %s484 = smul.addr %s483, 4
      %s485 = smul.addr %s484, 8
      %s486 = scalar_lea.vmem %s6, %s485
      %s487 = smul.u32 16, %s26
      %p488 = scmp.lt.s32.totalorder %s25, 1
      %s489 = scalar_select %p488, %s25, 1
      %p490 = scmp.lt.s32.totalorder %s487, 15
      %s491 = scalar_select %p490, %s487, 15
      %s492 = smul.addr %s489, 16
      %s493 = sadd.s32 %s491, %s492
      %s494 = smul.addr %s493, 8
      %s495 = scalar_lea.vmem %s8, %s494
      %s496 = smul.u32 16, %s26
      %p498 = scmp.eq.s32.totalorder %s28, 0
      // Predicated region
      $region53: #{tpu_custom_call.1} parent=51 // pred_check
        %p499 = pneg %p498
      $region54: #{tpu_custom_call.1} parent=51 // pred_check_branch
        %501 = sbr.rel (%p499) target = $region56
      $region55: #{tpu_custom_call.1} parent=51 // pred_region
        %v502 = vld [vmem:[%s450] sm:$0xff]
        %v503 = vld [vmem:[%s450 + $0x8] sm:$0xff]
        %v504 = vld [vmem:[%s450 + $0x10] sm:$0xff]
        %v505 = vld [vmem:[%s450 + $0x18] sm:$0xff]
        %v506 = vld [vmem:[%s450 + $0x20] sm:$0xff]
        %v507 = vld [vmem:[%s450 + $0x28] sm:$0xff]
        %v508 = vld [vmem:[%s450 + $0x30] sm:$0xff]
        %v509 = vld [vmem:[%s450 + $0x38] sm:$0xff]
        %v510 = vld [vmem:[%s450 + $0x40] sm:$0xff]
        %v511 = vld [vmem:[%s450 + $0x48] sm:$0xff]
        %v512 = vld [vmem:[%s450 + $0x50] sm:$0xff]
        %v513 = vld [vmem:[%s450 + $0x58] sm:$0xff]
        %v514 = vld [vmem:[%s450 + $0x60] sm:$0xff]
        %v515 = vld [vmem:[%s450 + $0x68] sm:$0xff]
        %v516 = vld [vmem:[%s450 + $0x70] sm:$0xff]
        %v517 = vld [vmem:[%s450 + $0x78] sm:$0xff]
        %v518 = vld [vmem:[%s472] sm:$0xf]
        %vm519 = vcmask 31744
        %v521 = vsel %vm519, %v502, 0
        %v524 = vsel %vm519, %v503, 0
        %v527 = vsel %vm519, %v504, 0
        %v530 = vsel %vm519, %v505, 0
        %v533 = vsel %vm519, %v506, 0
        %v536 = vsel %vm519, %v507, 0
        %v539 = vsel %vm519, %v508, 0
        %v542 = vsel %vm519, %v509, 0
        %v545 = vsel %vm519, %v510, 0
        %v548 = vsel %vm519, %v511, 0
        %v551 = vsel %vm519, %v512, 0
        %v554 = vsel %vm519, %v513, 0
        %v557 = vsel %vm519, %v514, 0
        %v560 = vsel %vm519, %v515, 0
        %v563 = vsel %vm519, %v516, 0
        %v566 = vsel %vm519, %v517, 0
        %vm568 = vcmask 1043456
        %v570 = vsel %vm568, %v518, 0
        %572 = vmatprep.subr.mxu0 0.0
        %573 = vmatpush1.msra.mxu0 %v570
        %574 = vmatprep.subr.mxu0 0.0
        %575 = vmatpush1.msra.mxu0 0.0
        %576 = vmatprep.subr.mxu0 0.0
        %577 = vmatpush1.msra.mxu0 0.0
        %578 = vmatprep.subr.mxu0 0.0
        %579 = vmatpush1.msra.mxu0 0.0
        %580 = vmatprep.subr.mxu0 0.0
        %581 = vmatpush1.msra.mxu0 0.0
        %582 = vmatprep.subr.mxu0 0.0
        %583 = vmatpush1.msra.mxu0 0.0
        %584 = vmatprep.subr.mxu0 0.0
        %585 = vmatpush1.msra.mxu0 0.0
        %586 = vmatprep.subr.mxu0 0.0
        %587 = vmatpush1.msra.mxu0 0.0
        %588 = vmatprep.subr.mxu0 0.0
        %589 = vmatpush1.msra.mxu0 0.0
        %590 = vmatprep.subr.mxu0 0.0
        %591 = vmatpush1.msra.mxu0 0.0
        %592 = vmatprep.subr.mxu0 0.0
        %593 = vmatpush1.msra.mxu0 0.0
        %594 = vmatprep.subr.mxu0 0.0
        %595 = vmatpush1.msra.mxu0 0.0
        %596 = vmatprep.subr.mxu0 0.0
        %597 = vmatpush1.msra.mxu0 0.0
        %598 = vmatprep.subr.mxu0 0.0
        %599 = vmatpush1.msra.mxu0 0.0
        %600 = vmatprep.subr.mxu0 0.0
        %601 = vmatpush1.msra.mxu0 0.0
        %602 = vmatprep.subr.mxu0 0.0
        %603 = vmatpush1.msra.mxu0 0.0
        %604 = vmatprep.subr.mxu0 0.0
        %605 = vmatpush1.msra.mxu0 0.0
        %606 = vmatprep.subr.mxu0 0.0
        %607 = vmatpush1.msra.mxu0 0.0
        %608 = vmatprep.subr.mxu0 0.0
        %609 = vmatpush1.msra.mxu0 0.0
        %610 = vmatprep.subr.mxu0 0.0
        %611 = vmatpush1.msra.mxu0 0.0
        %612 = vmatprep.subr.mxu0 0.0
        %613 = vmatpush1.msra.mxu0 0.0
        %614 = vmatprep.subr.mxu0 0.0
        %615 = vmatpush1.msra.mxu0 0.0
        %616 = vmatprep.subr.mxu0 0.0
        %617 = vmatpush1.msra.mxu0 0.0
        %618 = vmatprep.subr.mxu0 0.0
        %619 = vmatpush1.msra.mxu0 0.0
        %620 = vmatprep.subr.mxu0 0.0
        %621 = vmatpush1.msra.mxu0 0.0
        %622 = vmatprep.subr.mxu0 0.0
        %623 = vmatpush1.msra.mxu0 0.0
        %624 = vmatprep.subr.mxu0 0.0
        %625 = vmatpush1.msra.mxu0 0.0
        %626 = vmatprep.subr.mxu0 0.0
        %627 = vmatpush1.msra.mxu0 0.0
        %628 = vmatprep.subr.mxu0 0.0
        %629 = vmatpush1.msra.mxu0 0.0
        %630 = vmatprep.subr.mxu0 0.0
        %631 = vmatpush1.msra.mxu0 0.0
        %632 = vmatprep.subr.mxu0 0.0
        %633 = vmatpush1.msra.mxu0 0.0
        %634 = vmatprep.subr.mxu0 0.0
        %635 = vmatpush1.msra.mxu0 0.0
        %636 = vmatprep.mubr.f32.mxu0 0.0
        %637 = vmatmul.mubr.f32.gmra.mrb[0].mxu0 %v521
        %v638 = vpop.f32.mrb[0].mxu0
        %v639 = vadd.f32 0.0, %v638
        %v640 = vpop.f32.mrb[0].mxu0
        %641 = vmatprep.mubr.f32.mxu0 0.0
        %642 = vmatmul.mubr.f32.gmra.mrb[0].mxu0 %v524
        %v643 = vpop.f32.mrb[0].mxu0
        %v644 = vadd.f32 0.0, %v643
        %v645 = vpop.f32.mrb[0].mxu0
        %646 = vmatprep.mubr.f32.mxu0 0.0
        %647 = vmatmul.mubr.f32.gmra.mrb[0].mxu0 %v527
        %v648 = vpop.f32.mrb[0].mxu0
        %v649 = vadd.f32 0.0, %v648
        %v650 = vpop.f32.mrb[0].mxu0
        %651 = vmatprep.mubr.f32.mxu0 0.0
        %652 = vmatmul.mubr.f32.gmra.mrb[0].mxu0 %v530
        %v653 = vpop.f32.mrb[0].mxu0
        %v654 = vadd.f32 0.0, %v653
        %v655 = vpop.f32.mrb[0].mxu0
        %656 = vmatprep.mubr.f32.mxu0 0.0
        %657 = vmatmul.mubr.f32.gmra.mrb[0].mxu0 %v533
        %v658 = vpop.f32.mrb[0].mxu0
        %v659 = vadd.f32 0.0, %v658
        %v660 = vpop.f32.mrb[0].mxu0
        %661 = vmatprep.mubr.f32.mxu0 0.0
        %662 = vmatmul.mubr.f32.gmra.mrb[0].mxu0 %v536
        %v663 = vpop.f32.mrb[0].mxu0
        %v664 = vadd.f32 0.0, %v663
        %v665 = vpop.f32.mrb[0].mxu0
        %666 = vmatprep.mubr.f32.mxu0 0.0
        %667 = vmatmul.mubr.f32.gmra.mrb[0].mxu0 %v539
        %v668 = vpop.f32.mrb[0].mxu0
        %v669 = vadd.f32 0.0, %v668
        %v670 = vpop.f32.mrb[0].mxu0
        %671 = vmatprep.mubr.f32.mxu0 0.0
        %672 = vmatmul.mubr.f32.gmra.mrb[0].mxu0 %v542
        %v673 = vpop.f32.mrb[0].mxu0
        %v674 = vadd.f32 0.0, %v673
        %v675 = vpop.f32.mrb[0].mxu0
        %676 = vmatprep.mubr.f32.mxu0 0.0
        %677 = vmatmul.mubr.f32.gmra.mrb[0].mxu0 %v545
        %v678 = vpop.f32.mrb[0].mxu0
        %v679 = vadd.f32 0.0, %v678
        %v680 = vpop.f32.mrb[0].mxu0
        %681 = vmatprep.mubr.f32.mxu0 0.0
        %682 = vmatmul.mubr.f32.gmra.mrb[0].mxu0 %v548
        %v683 = vpop.f32.mrb[0].mxu0
        %v684 = vadd.f32 0.0, %v683
        %v685 = vpop.f32.mrb[0].mxu0
        %686 = vmatprep.mubr.f32.mxu0 0.0
        %687 = vmatmul.mubr.f32.gmra.mrb[0].mxu0 %v551
        %v688 = vpop.f32.mrb[0].mxu0
        %v689 = vadd.f32 0.0, %v688
        %v690 = vpop.f32.mrb[0].mxu0
        %691 = vmatprep.mubr.f32.mxu0 0.0
        %692 = vmatmul.mubr.f32.gmra.mrb[0].mxu0 %v554
        %v693 = vpop.f32.mrb[0].mxu0
        %v694 = vadd.f32 0.0, %v693
        %v695 = vpop.f32.mrb[0].mxu0
        %696 = vmatprep.mubr.f32.mxu0 0.0
        %697 = vmatmul.mubr.f32.gmra.mrb[0].mxu0 %v557
        %v698 = vpop.f32.mrb[0].mxu0
        %v699 = vadd.f32 0.0, %v698
        %v700 = vpop.f32.mrb[0].mxu0
        %701 = vmatprep.mubr.f32.mxu0 0.0
        %702 = vmatmul.mubr.f32.gmra.mrb[0].mxu0 %v560
        %v703 = vpop.f32.mrb[0].mxu0
        %v704 = vadd.f32 0.0, %v703
        %v705 = vpop.f32.mrb[0].mxu0
        %706 = vmatprep.mubr.f32.mxu0 0.0
        %707 = vmatmul.mubr.f32.gmra.mrb[0].mxu0 %v563
        %v708 = vpop.f32.mrb[0].mxu0
        %v709 = vadd.f32 0.0, %v708
        %v710 = vpop.f32.mrb[0].mxu0
        %711 = vmatprep.mubr.f32.mxu0 0.0
        %712 = vmatmul.mubr.f32.gmra.mrb[0].mxu0 %v566
        %v713 = vpop.f32.mrb[0].mxu0
        %v714 = vadd.f32 0.0, %v713
        %v715 = vpop.f32.mrb[0].mxu0
        %716 = vdwg.mxu0
        %v717 = vpack.c.bf16 %v644, %v639
        %v718 = vpack.c.bf16 %v654, %v649
        %v719 = vpack.c.bf16 %v664, %v659
        %v720 = vpack.c.bf16 %v674, %v669
        %v721 = vpack.c.bf16 %v684, %v679
        %v722 = vpack.c.bf16 %v694, %v689
        %v723 = vpack.c.bf16 %v704, %v699
        %v724 = vpack.c.bf16 %v714, %v709
        %vm725 = vcmask 261120
        %726 = vst.msk [vmem:[#allocation2] sm:$0xff] %vm725, %v717
        %727 = vst.msk [vmem:[#allocation2 + $0x8] sm:$0xff] %vm725, %v718
        %728 = vst.msk [vmem:[#allocation2 + $0x10] sm:$0xff] %vm725, %v719
        %729 = vst.msk [vmem:[#allocation2 + $0x18] sm:$0xff] %vm725, %v720
        %730 = vst.msk [vmem:[#allocation2 + $0x20] sm:$0xff] %vm725, %v721
        %731 = vst.msk [vmem:[#allocation2 + $0x28] sm:$0xff] %vm725, %v722
        %732 = vst.msk [vmem:[#allocation2 + $0x30] sm:$0xff] %vm725, %v723
        %733 = vst.msk [vmem:[#allocation2 + $0x38] sm:$0xff] %vm725, %v724
        %vm734 = vcmask 7168
        %735 = vst.msk [vmem:[#allocation3] sm:$0xff] %vm734, -inf
        %736 = vst.msk [vmem:[#allocation3 + $0x8] sm:$0xff] %vm734, -inf
        %737 = vst.msk [vmem:[#allocation3 + $0x10] sm:$0xff] %vm734, -inf
        %738 = vst.msk [vmem:[#allocation3 + $0x18] sm:$0xff] %vm734, -inf
        %739 = vst.msk [vmem:[#allocation3 + $0x20] sm:$0xff] %vm734, -inf
        %740 = vst.msk [vmem:[#allocation3 + $0x28] sm:$0xff] %vm734, -inf
        %741 = vst.msk [vmem:[#allocation3 + $0x30] sm:$0xff] %vm734, -inf
        %742 = vst.msk [vmem:[#allocation3 + $0x38] sm:$0xff] %vm734, -inf
        %743 = vst.msk [vmem:[#allocation3 + $0x40] sm:$0xff] %vm734, -inf
        %744 = vst.msk [vmem:[#allocation3 + $0x48] sm:$0xff] %vm734, -inf
        %745 = vst.msk [vmem:[#allocation3 + $0x50] sm:$0xff] %vm734, -inf
        %746 = vst.msk [vmem:[#allocation3 + $0x58] sm:$0xff] %vm734, -inf
        %747 = vst.msk [vmem:[#allocation3 + $0x60] sm:$0xff] %vm734, -inf
        %748 = vst.msk [vmem:[#allocation3 + $0x68] sm:$0xff] %vm734, -inf
        %749 = vst.msk [vmem:[#allocation3 + $0x70] sm:$0xff] %vm734, -inf
        %750 = vst.msk [vmem:[#allocation3 + $0x78] sm:$0xff] %vm734, -inf
        %751 = vst.msk [vmem:[#allocation4] sm:$0xff] %vm734, 0.0
        %752 = vst.msk [vmem:[#allocation4 + $0x8] sm:$0xff] %vm734, 0.0
        %753 = vst.msk [vmem:[#allocation4 + $0x10] sm:$0xff] %vm734, 0.0
        %754 = vst.msk [vmem:[#allocation4 + $0x18] sm:$0xff] %vm734, 0.0
        %755 = vst.msk [vmem:[#allocation4 + $0x20] sm:$0xff] %vm734, 0.0
        %756 = vst.msk [vmem:[#allocation4 + $0x28] sm:$0xff] %vm734, 0.0
        %757 = vst.msk [vmem:[#allocation4 + $0x30] sm:$0xff] %vm734, 0.0
        %758 = vst.msk [vmem:[#allocation4 + $0x38] sm:$0xff] %vm734, 0.0
        %759 = vst.msk [vmem:[#allocation4 + $0x40] sm:$0xff] %vm734, 0.0
        %760 = vst.msk [vmem:[#allocation4 + $0x48] sm:$0xff] %vm734, 0.0
        %761 = vst.msk [vmem:[#allocation4 + $0x50] sm:$0xff] %vm734, 0.0
        %762 = vst.msk [vmem:[#allocation4 + $0x58] sm:$0xff] %vm734, 0.0
        %763 = vst.msk [vmem:[#allocation4 + $0x60] sm:$0xff] %vm734, 0.0
        %764 = vst.msk [vmem:[#allocation4 + $0x68] sm:$0xff] %vm734, 0.0
        %765 = vst.msk [vmem:[#allocation4 + $0x70] sm:$0xff] %vm734, 0.0
        %766 = vst.msk [vmem:[#allocation4 + $0x78] sm:$0xff] %vm734, 0.0
        %767 = vst.msk [vmem:[#allocation5] sm:$0xff] %vm725, 0.0
        %768 = vst.msk [vmem:[#allocation5 + $0x8] sm:$0xff] %vm725, 0.0
        %769 = vst.msk [vmem:[#allocation5 + $0x10] sm:$0xff] %vm725, 0.0
        %770 = vst.msk [vmem:[#allocation5 + $0x18] sm:$0xff] %vm725, 0.0
        %771 = vst.msk [vmem:[#allocation5 + $0x20] sm:$0xff] %vm725, 0.0
        %772 = vst.msk [vmem:[#allocation5 + $0x28] sm:$0xff] %vm725, 0.0
        %773 = vst.msk [vmem:[#allocation5 + $0x30] sm:$0xff] %vm725, 0.0
        %774 = vst.msk [vmem:[#allocation5 + $0x38] sm:$0xff] %vm725, 0.0
        %775 = vst.msk [vmem:[#allocation5 + $0x40] sm:$0xff] %vm725, 0.0
        %776 = vst.msk [vmem:[#allocation5 + $0x48] sm:$0xff] %vm725, 0.0
        %777 = vst.msk [vmem:[#allocation5 + $0x50] sm:$0xff] %vm725, 0.0
        %778 = vst.msk [vmem:[#allocation5 + $0x58] sm:$0xff] %vm725, 0.0
        %779 = vst.msk [vmem:[#allocation5 + $0x60] sm:$0xff] %vm725, 0.0
        %780 = vst.msk [vmem:[#allocation5 + $0x68] sm:$0xff] %vm725, 0.0
        %781 = vst.msk [vmem:[#allocation5 + $0x70] sm:$0xff] %vm725, 0.0
        %782 = vst.msk [vmem:[#allocation5 + $0x78] sm:$0xff] %vm725, 0.0
      $region56: #{tpu_custom_call.1} parent=51 // pred_fallthru
        _
      %v783 = vld [vmem:[%s477] sm:$0xff]
      %v784 = vld [vmem:[%s477 + $0x8] sm:$0xff]
      %v785 = vld [vmem:[%s477 + $0x10] sm:$0xff]
      %v786 = vld [vmem:[%s477 + $0x18] sm:$0xff]
      %v787 = vld [vmem:[%s468] sm:$0xf]
      %vm788 = vcmask 31744
      %v790 = vsel %vm788, %v783, 0
      %v793 = vsel %vm788, %v784, 0
      %v796 = vsel %vm788, %v785, 0
      %v799 = vsel %vm788, %v786, 0
      %vm801 = vcmask 1043456
      %v803 = vsel %vm801, %v787, 0
      %805 = vmatprep.subr.mxu0 0.0
      %806 = vmatpush1.msra.mxu0 %v803
      %807 = vmatprep.subr.mxu0 0.0
      %808 = vmatpush1.msra.mxu0 0.0
      %809 = vmatprep.subr.mxu0 0.0
      %810 = vmatpush1.msra.mxu0 0.0
      %811 = vmatprep.subr.mxu0 0.0
      %812 = vmatpush1.msra.mxu0 0.0
      %813 = vmatprep.subr.mxu0 0.0
      %814 = vmatpush1.msra.mxu0 0.0
      %815 = vmatprep.subr.mxu0 0.0
      %816 = vmatpush1.msra.mxu0 0.0
      %817 = vmatprep.subr.mxu0 0.0
      %818 = vmatpush1.msra.mxu0 0.0
      %819 = vmatprep.subr.mxu0 0.0
      %820 = vmatpush1.msra.mxu0 0.0
      %821 = vmatprep.subr.mxu0 0.0
      %822 = vmatpush1.msra.mxu0 0.0
      %823 = vmatprep.subr.mxu0 0.0
      %824 = vmatpush1.msra.mxu0 0.0
      %825 = vmatprep.subr.mxu0 0.0
      %826 = vmatpush1.msra.mxu0 0.0
      %827 = vmatprep.subr.mxu0 0.0
      %828 = vmatpush1.msra.mxu0 0.0
      %829 = vmatprep.subr.mxu0 0.0
      %830 = vmatpush1.msra.mxu0 0.0
      %831 = vmatprep.subr.mxu0 0.0
      %832 = vmatpush1.msra.mxu0 0.0
      %833 = vmatprep.subr.mxu0 0.0
      %834 = vmatpush1.msra.mxu0 0.0
      %835 = vmatprep.subr.mxu0 0.0
      %836 = vmatpush1.msra.mxu0 0.0
      %837 = vmatprep.subr.mxu0 0.0
      %838 = vmatpush1.msra.mxu0 0.0
      %839 = vmatprep.subr.mxu0 0.0
      %840 = vmatpush1.msra.mxu0 0.0
      %841 = vmatprep.subr.mxu0 0.0
      %842 = vmatpush1.msra.mxu0 0.0
      %843 = vmatprep.subr.mxu0 0.0
      %844 = vmatpush1.msra.mxu0 0.0
      %845 = vmatprep.subr.mxu0 0.0
      %846 = vmatpush1.msra.mxu0 0.0
      %847 = vmatprep.subr.mxu0 0.0
      %848 = vmatpush1.msra.mxu0 0.0
      %849 = vmatprep.subr.mxu0 0.0
      %850 = vmatpush1.msra.mxu0 0.0
      %851 = vmatprep.subr.mxu0 0.0
      %852 = vmatpush1.msra.mxu0 0.0
      %853 = vmatprep.subr.mxu0 0.0
      %854 = vmatpush1.msra.mxu0 0.0
      %855 = vmatprep.subr.mxu0 0.0
      %856 = vmatpush1.msra.mxu0 0.0
      %857 = vmatprep.subr.mxu0 0.0
      %858 = vmatpush1.msra.mxu0 0.0
      %859 = vmatprep.subr.mxu0 0.0
      %860 = vmatpush1.msra.mxu0 0.0
      %861 = vmatprep.subr.mxu0 0.0
      %862 = vmatpush1.msra.mxu0 0.0
      %863 = vmatprep.subr.mxu0 0.0
      %864 = vmatpush1.msra.mxu0 0.0
      %865 = vmatprep.subr.mxu0 0.0
      %866 = vmatpush1.msra.mxu0 0.0
      %867 = vmatprep.subr.mxu0 0.0
      %868 = vmatpush1.msra.mxu0 0.0
      %869 = vmatprep.mubr.f32.mxu0 0.0
      %870 = vmatmul.mubr.f32.gmra.mrb[0].mxu0 %v790
      %v871 = vpop.f32.mrb[0].mxu0
      %v872 = vadd.f32 0.0, %v871
      %v873 = vpop.f32.mrb[0].mxu0
      %874 = vmatprep.mubr.f32.mxu0 0.0
      %875 = vmatmul.mubr.f32.gmra.mrb[0].mxu0 %v793
      %v876 = vpop.f32.mrb[0].mxu0
      %v877 = vadd.f32 0.0, %v876
      %v878 = vpop.f32.mrb[0].mxu0
      %879 = vmatprep.mubr.f32.mxu0 0.0
      %880 = vmatmul.mubr.f32.gmra.mrb[0].mxu0 %v796
      %v881 = vpop.f32.mrb[0].mxu0
      %v882 = vadd.f32 0.0, %v881
      %v883 = vpop.f32.mrb[0].mxu0
      %884 = vmatprep.mubr.f32.mxu0 0.0
      %885 = vmatmul.mubr.f32.gmra.mrb[0].mxu0 %v799
      %v886 = vpop.f32.mrb[0].mxu0
      %v887 = vadd.f32 0.0, %v886
      %v888 = vpop.f32.mrb[0].mxu0
      %889 = vdwg.mxu0
      %v890 = vpack.c.bf16 %v877, %v872
      %v891 = vpack.c.bf16 %v887, %v882
      %v892 = vld [vmem:[%s460] sm:$0xff]
      %v893 = vld [vmem:[%s460 + $0x8] sm:$0xff]
      %v894 = vld [vmem:[%s460 + $0x10] sm:$0xff]
      %v895 = vld [vmem:[%s460 + $0x18] sm:$0xff]
      %v896 = vld [vmem:[%s460 + $0x20] sm:$0xff]
      %v897 = vld [vmem:[%s460 + $0x28] sm:$0xff]
      %v898 = vld [vmem:[%s460 + $0x30] sm:$0xff]
      %v899 = vld [vmem:[%s460 + $0x38] sm:$0xff]
      %v900 = vld [vmem:[%s460 + $0x40] sm:$0xff]
      %v901 = vld [vmem:[%s460 + $0x48] sm:$0xff]
      %v902 = vld [vmem:[%s460 + $0x50] sm:$0xff]
      %v903 = vld [vmem:[%s460 + $0x58] sm:$0xff]
      %v904 = vld [vmem:[%s460 + $0x60] sm:$0xff]
      %v905 = vld [vmem:[%s460 + $0x68] sm:$0xff]
      %v906 = vld [vmem:[%s460 + $0x70] sm:$0xff]
      %v907 = vld [vmem:[%s460 + $0x78] sm:$0xff]
      %v908 = vld [vmem:[%s481] sm:$0xf]
      %v910 = vsel %vm788, %v892, 0
      %v913 = vsel %vm788, %v893, 0
      %v916 = vsel %vm788, %v894, 0
      %v919 = vsel %vm788, %v895, 0
      %v922 = vsel %vm788, %v896, 0
      %v925 = vsel %vm788, %v897, 0
      %v928 = vsel %vm788, %v898, 0
      %v931 = vsel %vm788, %v899, 0
      %v934 = vsel %vm788, %v900, 0
      %v937 = vsel %vm788, %v901, 0
      %v940 = vsel %vm788, %v902, 0
      %v943 = vsel %vm788, %v903, 0
      %v946 = vsel %vm788, %v904, 0
      %v949 = vsel %vm788, %v905, 0
      %v952 = vsel %vm788, %v906, 0
      %v955 = vsel %vm788, %v907, 0
      %v958 = vsel %vm801, %v908, 0
      %960 = vmatprep.subr.mxu0 0.0
      %961 = vmatpush1.msra.mxu0 %v958
      %962 = vmatprep.subr.mxu0 0.0
      %963 = vmatpush1.msra.mxu0 0.0
      %964 = vmatprep.subr.mxu0 0.0
      %965 = vmatpush1.msra.mxu0 0.0
      %966 = vmatprep.subr.mxu0 0.0
      %967 = vmatpush1.msra.mxu0 0.0
      %968 = vmatprep.subr.mxu0 0.0
      %969 = vmatpush1.msra.mxu0 0.0
      %970 = vmatprep.subr.mxu0 0.0
      %971 = vmatpush1.msra.mxu0 0.0
      %972 = vmatprep.subr.mxu0 0.0
      %973 = vmatpush1.msra.mxu0 0.0
      %974 = vmatprep.subr.mxu0 0.0
      %975 = vmatpush1.msra.mxu0 0.0
      %976 = vmatprep.subr.mxu0 0.0
      %977 = vmatpush1.msra.mxu0 0.0
      %978 = vmatprep.subr.mxu0 0.0
      %979 = vmatpush1.msra.mxu0 0.0
      %980 = vmatprep.subr.mxu0 0.0
      %981 = vmatpush1.msra.mxu0 0.0
      %982 = vmatprep.subr.mxu0 0.0
      %983 = vmatpush1.msra.mxu0 0.0
      %984 = vmatprep.subr.mxu0 0.0
      %985 = vmatpush1.msra.mxu0 0.0
      %986 = vmatprep.subr.mxu0 0.0
      %987 = vmatpush1.msra.mxu0 0.0
      %988 = vmatprep.subr.mxu0 0.0
      %989 = vmatpush1.msra.mxu0 0.0
      %990 = vmatprep.subr.mxu0 0.0
      %991 = vmatpush1.msra.mxu0 0.0
      %992 = vmatprep.subr.mxu0 0.0
      %993 = vmatpush1.msra.mxu0 0.0
      %994 = vmatprep.subr.mxu0 0.0
      %995 = vmatpush1.msra.mxu0 0.0
      %996 = vmatprep.subr.mxu0 0.0
      %997 = vmatpush1.msra.mxu0 0.0
      %998 = vmatprep.subr.mxu0 0.0
      %999 = vmatpush1.msra.mxu0 0.0
      %1000 = vmatprep.subr.mxu0 0.0
      %1001 = vmatpush1.msra.mxu0 0.0
      %1002 = vmatprep.subr.mxu0 0.0
      %1003 = vmatpush1.msra.mxu0 0.0
      %1004 = vmatprep.subr.mxu0 0.0
      %1005 = vmatpush1.msra.mxu0 0.0
      %1006 = vmatprep.subr.mxu0 0.0
      %1007 = vmatpush1.msra.mxu0 0.0
      %1008 = vmatprep.subr.mxu0 0.0
      %1009 = vmatpush1.msra.mxu0 0.0
      %1010 = vmatprep.subr.mxu0 0.0
      %1011 = vmatpush1.msra.mxu0 0.0
      %1012 = vmatprep.subr.mxu0 0.0
      %1013 = vmatpush1.msra.mxu0 0.0
      %1014 = vmatprep.subr.mxu0 0.0
      %1015 = vmatpush1.msra.mxu0 0.0
      %1016 = vmatprep.subr.mxu0 0.0
      %1017 = vmatpush1.msra.mxu0 0.0
      %1018 = vmatprep.subr.mxu0 0.0
      %1019 = vmatpush1.msra.mxu0 0.0
      %1020 = vmatprep.subr.mxu0 0.0
      %1021 = vmatpush1.msra.mxu0 0.0
      %1022 = vmatprep.subr.mxu0 0.0
      %1023 = vmatpush1.msra.mxu0 0.0
      %1024 = vmatprep.mubr.f32.mxu0 0.0
      %1025 = vmatmul.mubr.f32.gmra.mrb[0].mxu0 %v910
      %v1026 = vpop.f32.mrb[0].mxu0
      %v1027 = vadd.f32 0.0, %v1026
      %v1028 = vpop.f32.mrb[0].mxu0
      %1029 = vmatprep.mubr.f32.mxu0 0.0
      %1030 = vmatmul.mubr.f32.gmra.mrb[0].mxu0 %v913
      %v1031 = vpop.f32.mrb[0].mxu0
      %v1032 = vadd.f32 0.0, %v1031
      %v1033 = vpop.f32.mrb[0].mxu0
      %1034 = vmatprep.mubr.f32.mxu0 0.0
      %1035 = vmatmul.mubr.f32.gmra.mrb[0].mxu0 %v916
      %v1036 = vpop.f32.mrb[0].mxu0
      %v1037 = vadd.f32 0.0, %v1036
      %v1038 = vpop.f32.mrb[0].mxu0
      %1039 = vmatprep.mubr.f32.mxu0 0.0
      %1040 = vmatmul.mubr.f32.gmra.mrb[0].mxu0 %v919
      %v1041 = vpop.f32.mrb[0].mxu0
      %v1042 = vadd.f32 0.0, %v1041
      %v1043 = vpop.f32.mrb[0].mxu0
      %1044 = vmatprep.mubr.f32.mxu0 0.0
      %1045 = vmatmul.mubr.f32.gmra.mrb[0].mxu0 %v922
      %v1046 = vpop.f32.mrb[0].mxu0
      %v1047 = vadd.f32 0.0, %v1046
      %v1048 = vpop.f32.mrb[0].mxu0
      %1049 = vmatprep.mubr.f32.mxu0 0.0
      %1050 = vmatmul.mubr.f32.gmra.mrb[0].mxu0 %v925
      %v1051 = vpop.f32.mrb[0].mxu0
      %v1052 = vadd.f32 0.0, %v1051
      %v1053 = vpop.f32.mrb[0].mxu0
      %1054 = vmatprep.mubr.f32.mxu0 0.0
      %1055 = vmatmul.mubr.f32.gmra.mrb[0].mxu0 %v928
      %v1056 = vpop.f32.mrb[0].mxu0
      %v1057 = vadd.f32 0.0, %v1056
      %v1058 = vpop.f32.mrb[0].mxu0
      %1059 = vmatprep.mubr.f32.mxu0 0.0
      %1060 = vmatmul.mubr.f32.gmra.mrb[0].mxu0 %v931
      %v1061 = vpop.f32.mrb[0].mxu0
      %v1062 = vadd.f32 0.0, %v1061
      %v1063 = vpop.f32.mrb[0].mxu0
      %1064 = vmatprep.mubr.f32.mxu0 0.0
      %1065 = vmatmul.mubr.f32.gmra.mrb[0].mxu0 %v934
      %v1066 = vpop.f32.mrb[0].mxu0
      %v1067 = vadd.f32 0.0, %v1066
      %v1068 = vpop.f32.mrb[0].mxu0
      %1069 = vmatprep.mubr.f32.mxu0 0.0
      %1070 = vmatmul.mubr.f32.gmra.mrb[0].mxu0 %v937
      %v1071 = vpop.f32.mrb[0].mxu0
      %v1072 = vadd.f32 0.0, %v1071
      %v1073 = vpop.f32.mrb[0].mxu0
      %1074 = vmatprep.mubr.f32.mxu0 0.0
      %1075 = vmatmul.mubr.f32.gmra.mrb[0].mxu0 %v940
      %v1076 = vpop.f32.mrb[0].mxu0
      %v1077 = vadd.f32 0.0, %v1076
      %v1078 = vpop.f32.mrb[0].mxu0
      %1079 = vmatprep.mubr.f32.mxu0 0.0
      %1080 = vmatmul.mubr.f32.gmra.mrb[0].mxu0 %v943
      %v1081 = vpop.f32.mrb[0].mxu0
      %v1082 = vadd.f32 0.0, %v1081
      %v1083 = vpop.f32.mrb[0].mxu0
      %1084 = vmatprep.mubr.f32.mxu0 0.0
      %1085 = vmatmul.mubr.f32.gmra.mrb[0].mxu0 %v946
      %v1086 = vpop.f32.mrb[0].mxu0
      %v1087 = vadd.f32 0.0, %v1086
      %v1088 = vpop.f32.mrb[0].mxu0
      %1089 = vmatprep.mubr.f32.mxu0 0.0
      %1090 = vmatmul.mubr.f32.gmra.mrb[0].mxu0 %v949
      %v1091 = vpop.f32.mrb[0].mxu0
      %v1092 = vadd.f32 0.0, %v1091
      %v1093 = vpop.f32.mrb[0].mxu0
      %1094 = vmatprep.mubr.f32.mxu0 0.0
      %1095 = vmatmul.mubr.f32.gmra.mrb[0].mxu0 %v952
      %v1096 = vpop.f32.mrb[0].mxu0
      %v1097 = vadd.f32 0.0, %v1096
      %v1098 = vpop.f32.mrb[0].mxu0
      %1099 = vmatprep.mubr.f32.mxu0 0.0
      %1100 = vmatmul.mubr.f32.gmra.mrb[0].mxu0 %v955
      %v1101 = vpop.f32.mrb[0].mxu0
      %v1102 = vadd.f32 0.0, %v1101
      %v1103 = vpop.f32.mrb[0].mxu0
      %1104 = vdwg.mxu0
      %v1105 = vpack.c.bf16 %v1032, %v1027
      %v1106 = vpack.c.bf16 %v1042, %v1037
      %v1107 = vpack.c.bf16 %v1052, %v1047
      %v1108 = vpack.c.bf16 %v1062, %v1057
      %v1109 = vpack.c.bf16 %v1072, %v1067
      %v1110 = vpack.c.bf16 %v1082, %v1077
      %v1111 = vpack.c.bf16 %v1092, %v1087
      %v1112 = vpack.c.bf16 %v1102, %v1097
      %v1113 = vld [vmem:[#allocation2] sm:$0xff]
      %v1114 = vld [vmem:[#allocation2 + $0x8] sm:$0xff]
      %v1115 = vld [vmem:[#allocation2 + $0x10] sm:$0xff]
      %v1116 = vld [vmem:[#allocation2 + $0x18] sm:$0xff]
      %v1117 = vld [vmem:[#allocation2 + $0x20] sm:$0xff]
      %v1118 = vld [vmem:[#allocation2 + $0x28] sm:$0xff]
      %v1119 = vld [vmem:[#allocation2 + $0x30] sm:$0xff]
      %v1120 = vld [vmem:[#allocation2 + $0x38] sm:$0xff]
      %vm1121 = vcmask 261120
      %v1123 = vsel %vm1121, %v1113, 0
      %v1126 = vsel %vm1121, %v1114, 0
      %v1129 = vsel %vm1121, %v1115, 0
      %v1132 = vsel %vm1121, %v1116, 0
      %v1135 = vsel %vm1121, %v1117, 0
      %v1138 = vsel %vm1121, %v1118, 0
      %v1141 = vsel %vm1121, %v1119, 0
      %v1144 = vsel %vm1121, %v1120, 0
      %1146 = vmatprep.subr.bf16.mxu0 0
      %1147 = vmatpush1.bf16.msra.mxu0 %v890
      %1148 = vmatprep.subr.bf16.mxu0 0
      %1149 = vmatpush1.bf16.msra.mxu0 %v891
      %1150 = vmatprep.subr.bf16.mxu0 0
      %1151 = vmatpush1.bf16.msra.mxu0 0
      %1152 = vmatprep.subr.bf16.mxu0 0
      %1153 = vmatpush1.bf16.msra.mxu0 0
      %1154 = vmatprep.subr.bf16.mxu0 0
      %1155 = vmatpush1.bf16.msra.mxu0 0
      %1156 = vmatprep.subr.bf16.mxu0 0
      %1157 = vmatpush1.bf16.msra.mxu0 0
      %1158 = vmatprep.subr.bf16.mxu0 0
      %1159 = vmatpush1.bf16.msra.mxu0 0
      %1160 = vmatprep.subr.bf16.mxu0 0
      %1161 = vmatpush1.bf16.msra.mxu0 0
      %1162 = vmatprep.subr.bf16.mxu0 0
      %1163 = vmatpush1.bf16.msra.mxu0 0
      %1164 = vmatprep.subr.bf16.mxu0 0
      %1165 = vmatpush1.bf16.msra.mxu0 0
      %1166 = vmatprep.subr.bf16.mxu0 0
      %1167 = vmatpush1.bf16.msra.mxu0 0
      %1168 = vmatprep.subr.bf16.mxu0 0
      %1169 = vmatpush1.bf16.msra.mxu0 0
      %1170 = vmatprep.subr.bf16.mxu0 0
      %1171 = vmatpush1.bf16.msra.mxu0 0
      %1172 = vmatprep.subr.bf16.mxu0 0
      %1173 = vmatpush1.bf16.msra.mxu0 0
      %1174 = vmatprep.subr.bf16.mxu0 0
      %1175 = vmatpush1.bf16.msra.mxu0 0
      %1176 = vmatprep.subr.bf16.mxu0 0
      %1177 = vmatpush1.bf16.msra.mxu0 0
      %1178 = vmatprep.mubr.bf16.mxu0 0
      %1179 = vmatmul.mubr.bf16.gmra.mrb[0].mxu0 %v1123
      %v1180 = vpop.f32.mrb[0].mxu0
      %v1181 = vadd.f32 0.0, %v1180
      %v1182 = vpop.f32.mrb[0].mxu0
      %v1183 = vpop.f32.mrb[0].mxu0
      %v1184 = vadd.f32 0.0, %v1183
      %v1185 = vpop.f32.mrb[0].mxu0
      %1186 = vmatprep.mubr.bf16.mxu0 0
      %1187 = vmatmul.mubr.bf16.gmra.mrb[0].mxu0 %v1126
      %v1188 = vpop.f32.mrb[0].mxu0
      %v1189 = vadd.f32 0.0, %v1188
      %v1190 = vpop.f32.mrb[0].mxu0
      %v1191 = vpop.f32.mrb[0].mxu0
      %v1192 = vadd.f32 0.0, %v1191
      %v1193 = vpop.f32.mrb[0].mxu0
      %1194 = vmatprep.mubr.bf16.mxu0 0
      %1195 = vmatmul.mubr.bf16.gmra.mrb[0].mxu0 %v1129
      %v1196 = vpop.f32.mrb[0].mxu0
      %v1197 = vadd.f32 0.0, %v1196
      %v1198 = vpop.f32.mrb[0].mxu0
      %v1199 = vpop.f32.mrb[0].mxu0
      %v1200 = vadd.f32 0.0, %v1199
      %v1201 = vpop.f32.mrb[0].mxu0
      %1202 = vmatprep.mubr.bf16.mxu0 0
      %1203 = vmatmul.mubr.bf16.gmra.mrb[0].mxu0 %v1132
      %v1204 = vpop.f32.mrb[0].mxu0
      %v1205 = vadd.f32 0.0, %v1204
      %v1206 = vpop.f32.mrb[0].mxu0
      %v1207 = vpop.f32.mrb[0].mxu0
      %v1208 = vadd.f32 0.0, %v1207
      %v1209 = vpop.f32.mrb[0].mxu0
      %1210 = vmatprep.mubr.bf16.mxu0 0
      %1211 = vmatmul.mubr.bf16.gmra.mrb[0].mxu0 %v1135
      %v1212 = vpop.f32.mrb[0].mxu0
      %v1213 = vadd.f32 0.0, %v1212
      %v1214 = vpop.f32.mrb[0].mxu0
      %v1215 = vpop.f32.mrb[0].mxu0
      %v1216 = vadd.f32 0.0, %v1215
      %v1217 = vpop.f32.mrb[0].mxu0
      %1218 = vmatprep.mubr.bf16.mxu0 0
      %1219 = vmatmul.mubr.bf16.gmra.mrb[0].mxu0 %v1138
      %v1220 = vpop.f32.mrb[0].mxu0
      %v1221 = vadd.f32 0.0, %v1220
      %v1222 = vpop.f32.mrb[0].mxu0
      %v1223 = vpop.f32.mrb[0].mxu0
      %v1224 = vadd.f32 0.0, %v1223
      %v1225 = vpop.f32.mrb[0].mxu0
      %1226 = vmatprep.mubr.bf16.mxu0 0
      %1227 = vmatmul.mubr.bf16.gmra.mrb[0].mxu0 %v1141
      %v1228 = vpop.f32.mrb[0].mxu0
      %v1229 = vadd.f32 0.0, %v1228
      %v1230 = vpop.f32.mrb[0].mxu0
      %v1231 = vpop.f32.mrb[0].mxu0
      %v1232 = vadd.f32 0.0, %v1231
      %v1233 = vpop.f32.mrb[0].mxu0
      %1234 = vmatprep.mubr.bf16.mxu0 0
      %1235 = vmatmul.mubr.bf16.gmra.mrb[0].mxu0 %v1144
      %v1236 = vpop.f32.mrb[0].mxu0
      %v1237 = vadd.f32 0.0, %v1236
      %v1238 = vpop.f32.mrb[0].mxu0
      %v1239 = vpop.f32.mrb[0].mxu0
      %v1240 = vadd.f32 0.0, %v1239
      %v1241 = vpop.f32.mrb[0].mxu0
      %1242 = vdwg.mxu0
      %s1243 = smul.u32 %s28, 128
      %v1244 = vlaneseq
      %v1245 = vand.u32 %v1244, 127
      %v1246 = vstv %s1243
      %v1247 = vadd.s32 %v1246, %v1245
      %vm1248 = vcmp.lt.s32.totalorder %v1247, 16
      %v1249 = vsel %vm1248, %v1181, -1e+30
      %v1250 = vsel %vm1248, %v1184, -1e+30
      %v1251 = vsel %vm1248, %v1189, -1e+30
      %v1252 = vsel %vm1248, %v1192, -1e+30
      %v1253 = vsel %vm1248, %v1197, -1e+30
      %v1254 = vsel %vm1248, %v1200, -1e+30
      %v1255 = vsel %vm1248, %v1205, -1e+30
      %v1256 = vsel %vm1248, %v1208, -1e+30
      %v1257 = vsel %vm1248, %v1213, -1e+30
      %v1258 = vsel %vm1248, %v1216, -1e+30
      %v1259 = vsel %vm1248, %v1221, -1e+30
      %v1260 = vsel %vm1248, %v1224, -1e+30
      %v1261 = vsel %vm1248, %v1229, -1e+30
      %v1262 = vsel %vm1248, %v1232, -1e+30
      %v1263 = vsel %vm1248, %v1237, -1e+30
      %v1264 = vsel %vm1248, %v1240, -1e+30
      %v1265 = vld [vmem:[#allocation3] sm:$0xff]
      %v1266 = vld [vmem:[#allocation3 + $0x8] sm:$0xff]
      %v1267 = vld [vmem:[#allocation3 + $0x10] sm:$0xff]
      %v1268 = vld [vmem:[#allocation3 + $0x18] sm:$0xff]
      %v1269 = vld [vmem:[#allocation3 + $0x20] sm:$0xff]
      %v1270 = vld [vmem:[#allocation3 + $0x28] sm:$0xff]
      %v1271 = vld [vmem:[#allocation3 + $0x30] sm:$0xff]
      %v1272 = vld [vmem:[#allocation3 + $0x38] sm:$0xff]
      %v1273 = vld [vmem:[#allocation3 + $0x40] sm:$0xff]
      %v1274 = vld [vmem:[#allocation3 + $0x48] sm:$0xff]
      %v1275 = vld [vmem:[#allocation3 + $0x50] sm:$0xff]
      %v1276 = vld [vmem:[#allocation3 + $0x58] sm:$0xff]
      %v1277 = vld [vmem:[#allocation3 + $0x60] sm:$0xff]
      %v1278 = vld [vmem:[#allocation3 + $0x68] sm:$0xff]
      %v1279 = vld [vmem:[#allocation3 + $0x70] sm:$0xff]
      %v1280 = vld [vmem:[#allocation3 + $0x78] sm:$0xff]
      %1281 = vmax.xlane.f32.xlu0 %v1249
      %v1282 = vpop.xlane.xlu0 %1281
      %1283 = vmax.xlane.f32.xlu0 %v1250
      %v1284 = vpop.xlane.xlu0 %1283
      %1285 = vmax.xlane.f32.xlu0 %v1251
      %v1286 = vpop.xlane.xlu0 %1285
      %1287 = vmax.xlane.f32.xlu0 %v1252
      %v1288 = vpop.xlane.xlu0 %1287
      %1289 = vmax.xlane.f32.xlu0 %v1253
      %v1290 = vpop.xlane.xlu0 %1289
      %1291 = vmax.xlane.f32.xlu0 %v1254
      %v1292 = vpop.xlane.xlu0 %1291
      %1293 = vmax.xlane.f32.xlu0 %v1255
      %v1294 = vpop.xlane.xlu0 %1293
      %1295 = vmax.xlane.f32.xlu0 %v1256
      %v1296 = vpop.xlane.xlu0 %1295
      %1297 = vmax.xlane.f32.xlu0 %v1257
      %v1298 = vpop.xlane.xlu0 %1297
      %1299 = vmax.xlane.f32.xlu0 %v1258
      %v1300 = vpop.xlane.xlu0 %1299
      %1301 = vmax.xlane.f32.xlu0 %v1259
      %v1302 = vpop.xlane.xlu0 %1301
      %1303 = vmax.xlane.f32.xlu0 %v1260
      %v1304 = vpop.xlane.xlu0 %1303
      %1305 = vmax.xlane.f32.xlu0 %v1261
      %v1306 = vpop.xlane.xlu0 %1305
      %1307 = vmax.xlane.f32.xlu0 %v1262
      %v1308 = vpop.xlane.xlu0 %1307
      %1309 = vmax.xlane.f32.xlu0 %v1263
      %v1310 = vpop.xlane.xlu0 %1309
      %1311 = vmax.xlane.f32.xlu0 %v1264
      %v1312 = vpop.xlane.xlu0 %1311
      %v1313 = vmax.f32 %v1265, %v1282
      %v1314 = vmax.f32 %v1266, %v1284
      %v1315 = vmax.f32 %v1267, %v1286
      %v1316 = vmax.f32 %v1268, %v1288
      %v1317 = vmax.f32 %v1269, %v1290
      %v1318 = vmax.f32 %v1270, %v1292
      %v1319 = vmax.f32 %v1271, %v1294
      %v1320 = vmax.f32 %v1272, %v1296
      %v1321 = vmax.f32 %v1273, %v1298
      %v1322 = vmax.f32 %v1274, %v1300
      %v1323 = vmax.f32 %v1275, %v1302
      %v1324 = vmax.f32 %v1276, %v1304
      %v1325 = vmax.f32 %v1277, %v1306
      %v1326 = vmax.f32 %v1278, %v1308
      %v1327 = vmax.f32 %v1279, %v1310
      %v1328 = vmax.f32 %v1280, %v1312
      %v1329 = vsub.f32 %v1265, %v1313
      %v1330 = vsub.f32 %v1266, %v1314
      %v1331 = vsub.f32 %v1267, %v1315
      %v1332 = vsub.f32 %v1268, %v1316
      %v1333 = vsub.f32 %v1269, %v1317
      %v1334 = vsub.f32 %v1270, %v1318
      %v1335 = vsub.f32 %v1271, %v1319
      %v1336 = vsub.f32 %v1272, %v1320
      %v1337 = vsub.f32 %v1273, %v1321
      %v1338 = vsub.f32 %v1274, %v1322
      %v1339 = vsub.f32 %v1275, %v1323
      %v1340 = vsub.f32 %v1276, %v1324
      %v1341 = vsub.f32 %v1277, %v1325
      %v1342 = vsub.f32 %v1278, %v1326
      %v1343 = vsub.f32 %v1279, %v1327
      %v1344 = vsub.f32 %v1280, %v1328
      %v1345 = vmul.f32 %v1329, 1.442695
      %v1346 = vpow.pop %v1345
      %v1347 = vmul.f32 %v1330, 1.442695
      %v1348 = vpow.pop %v1347
      %v1349 = vmul.f32 %v1331, 1.442695
      %v1350 = vpow.pop %v1349
      %v1351 = vmul.f32 %v1332, 1.442695
      %v1352 = vpow.pop %v1351
      %v1353 = vmul.f32 %v1333, 1.442695
      %v1354 = vpow.pop %v1353
      %v1355 = vmul.f32 %v1334, 1.442695
      %v1356 = vpow.pop %v1355
      %v1357 = vmul.f32 %v1335, 1.442695
      %v1358 = vpow.pop %v1357
      %v1359 = vmul.f32 %v1336, 1.442695
      %v1360 = vpow.pop %v1359
      %v1361 = vmul.f32 %v1337, 1.442695
      %v1362 = vpow.pop %v1361
      %v1363 = vmul.f32 %v1338, 1.442695
      %v1364 = vpow.pop %v1363
      %v1365 = vmul.f32 %v1339, 1.442695
      %v1366 = vpow.pop %v1365
      %v1367 = vmul.f32 %v1340, 1.442695
      %v1368 = vpow.pop %v1367
      %v1369 = vmul.f32 %v1341, 1.442695
      %v1370 = vpow.pop %v1369
      %v1371 = vmul.f32 %v1342, 1.442695
      %v1372 = vpow.pop %v1371
      %v1373 = vmul.f32 %v1343, 1.442695
      %v1374 = vpow.pop %v1373
      %v1375 = vmul.f32 %v1344, 1.442695
      %v1376 = vpow.pop %v1375
      %1378 = vset.pattern.permute.xlu0 0
      %1379 = vperm.xlu0 %1378, %v1313
      %v1380 = vpop.permute.xlu0 %1379
      %1383 = vset.pattern.permute.xlu0 0
      %1384 = vperm.xlu0 %1383, %v1314
      %v1385 = vpop.permute.xlu0 %1384
      %1388 = vset.pattern.permute.xlu0 0
      %1389 = vperm.xlu0 %1388, %v1315
      %v1390 = vpop.permute.xlu0 %1389
      %1393 = vset.pattern.permute.xlu0 0
      %1394 = vperm.xlu0 %1393, %v1316
      %v1395 = vpop.permute.xlu0 %1394
      %1398 = vset.pattern.permute.xlu0 0
      %1399 = vperm.xlu0 %1398, %v1317
      %v1400 = vpop.permute.xlu0 %1399
      %1403 = vset.pattern.permute.xlu0 0
      %1404 = vperm.xlu0 %1403, %v1318
      %v1405 = vpop.permute.xlu0 %1404
      %1408 = vset.pattern.permute.xlu0 0
      %1409 = vperm.xlu0 %1408, %v1319
      %v1410 = vpop.permute.xlu0 %1409
      %1413 = vset.pattern.permute.xlu0 0
      %1414 = vperm.xlu0 %1413, %v1320
      %v1415 = vpop.permute.xlu0 %1414
      %1418 = vset.pattern.permute.xlu0 0
      %1419 = vperm.xlu0 %1418, %v1321
      %v1420 = vpop.permute.xlu0 %1419
      %1423 = vset.pattern.permute.xlu0 0
      %1424 = vperm.xlu0 %1423, %v1322
      %v1425 = vpop.permute.xlu0 %1424
      %1428 = vset.pattern.permute.xlu0 0
      %1429 = vperm.xlu0 %1428, %v1323
      %v1430 = vpop.permute.xlu0 %1429
      %1433 = vset.pattern.permute.xlu0 0
      %1434 = vperm.xlu0 %1433, %v1324
      %v1435 = vpop.permute.xlu0 %1434
      %1438 = vset.pattern.permute.xlu0 0
      %1439 = vperm.xlu0 %1438, %v1325
      %v1440 = vpop.permute.xlu0 %1439
      %1443 = vset.pattern.permute.xlu0 0
      %1444 = vperm.xlu0 %1443, %v1326
      %v1445 = vpop.permute.xlu0 %1444
      %1448 = vset.pattern.permute.xlu0 0
      %1449 = vperm.xlu0 %1448, %v1327
      %v1450 = vpop.permute.xlu0 %1449
      %1453 = vset.pattern.permute.xlu0 0
      %1454 = vperm.xlu0 %1453, %v1328
      %v1455 = vpop.permute.xlu0 %1454
      %v1457 = vsub.f32 %v1249, %v1380
      %v1458 = vsub.f32 %v1250, %v1385
      %v1459 = vsub.f32 %v1251, %v1390
      %v1460 = vsub.f32 %v1252, %v1395
      %v1461 = vsub.f32 %v1253, %v1400
      %v1462 = vsub.f32 %v1254, %v1405
      %v1463 = vsub.f32 %v1255, %v1410
      %v1464 = vsub.f32 %v1256, %v1415
      %v1465 = vsub.f32 %v1257, %v1420
      %v1466 = vsub.f32 %v1258, %v1425
      %v1467 = vsub.f32 %v1259, %v1430
      %v1468 = vsub.f32 %v1260, %v1435
      %v1469 = vsub.f32 %v1261, %v1440
      %v1470 = vsub.f32 %v1262, %v1445
      %v1471 = vsub.f32 %v1263, %v1450
      %v1472 = vsub.f32 %v1264, %v1455
      %v1473 = vmul.f32 %v1457, 1.442695
      %v1474 = vpow.pop %v1473
      %v1475 = vmul.f32 %v1458, 1.442695
      %v1476 = vpow.pop %v1475
      %v1477 = vmul.f32 %v1459, 1.442695
      %v1478 = vpow.pop %v1477
      %v1479 = vmul.f32 %v1460, 1.442695
      %v1480 = vpow.pop %v1479
      %v1481 = vmul.f32 %v1461, 1.442695
      %v1482 = vpow.pop %v1481
      %v1483 = vmul.f32 %v1462, 1.442695
      %v1484 = vpow.pop %v1483
      %v1485 = vmul.f32 %v1463, 1.442695
      %v1486 = vpow.pop %v1485
      %v1487 = vmul.f32 %v1464, 1.442695
      %v1488 = vpow.pop %v1487
      %v1489 = vmul.f32 %v1465, 1.442695
      %v1490 = vpow.pop %v1489
      %v1491 = vmul.f32 %v1466, 1.442695
      %v1492 = vpow.pop %v1491
      %v1493 = vmul.f32 %v1467, 1.442695
      %v1494 = vpow.pop %v1493
      %v1495 = vmul.f32 %v1468, 1.442695
      %v1496 = vpow.pop %v1495
      %v1497 = vmul.f32 %v1469, 1.442695
      %v1498 = vpow.pop %v1497
      %v1499 = vmul.f32 %v1470, 1.442695
      %v1500 = vpow.pop %v1499
      %v1501 = vmul.f32 %v1471, 1.442695
      %v1502 = vpow.pop %v1501
      %v1503 = vmul.f32 %v1472, 1.442695
      %v1504 = vpow.pop %v1503
      %1505 = vadd.xlane.f32.xlu0 %v1474
      %v1506 = vpop.xlane.xlu0 %1505
      %1507 = vadd.xlane.f32.xlu0 %v1476
      %v1508 = vpop.xlane.xlu0 %1507
      %1509 = vadd.xlane.f32.xlu0 %v1478
      %v1510 = vpop.xlane.xlu0 %1509
      %1511 = vadd.xlane.f32.xlu0 %v1480
      %v1512 = vpop.xlane.xlu0 %1511
      %1513 = vadd.xlane.f32.xlu0 %v1482
      %v1514 = vpop.xlane.xlu0 %1513
      %1515 = vadd.xlane.f32.xlu0 %v1484
      %v1516 = vpop.xlane.xlu0 %1515
      %1517 = vadd.xlane.f32.xlu0 %v1486
      %v1518 = vpop.xlane.xlu0 %1517
      %1519 = vadd.xlane.f32.xlu0 %v1488
      %v1520 = vpop.xlane.xlu0 %1519
      %1521 = vadd.xlane.f32.xlu0 %v1490
      %v1522 = vpop.xlane.xlu0 %1521
      %1523 = vadd.xlane.f32.xlu0 %v1492
      %v1524 = vpop.xlane.xlu0 %1523
      %1525 = vadd.xlane.f32.xlu0 %v1494
      %v1526 = vpop.xlane.xlu0 %1525
      %1527 = vadd.xlane.f32.xlu0 %v1496
      %v1528 = vpop.xlane.xlu0 %1527
      %1529 = vadd.xlane.f32.xlu0 %v1498
      %v1530 = vpop.xlane.xlu0 %1529
      %1531 = vadd.xlane.f32.xlu0 %v1500
      %v1532 = vpop.xlane.xlu0 %1531
      %1533 = vadd.xlane.f32.xlu0 %v1502
      %v1534 = vpop.xlane.xlu0 %1533
      %1535 = vadd.xlane.f32.xlu0 %v1504
      %v1536 = vpop.xlane.xlu0 %1535
      %v1537 = vpack.c.bf16 %v1476, %v1474
      %v1538 = vpack.c.bf16 %v1480, %v1478
      %v1539 = vpack.c.bf16 %v1484, %v1482
      %v1540 = vpack.c.bf16 %v1488, %v1486
      %v1541 = vpack.c.bf16 %v1492, %v1490
      %v1542 = vpack.c.bf16 %v1496, %v1494
      %v1543 = vpack.c.bf16 %v1500, %v1498
      %v1544 = vpack.c.bf16 %v1504, %v1502
      %vm1545 = vcmask 7168
      %1546 = vst.msk [vmem:[#allocation3] sm:$0xff] %vm1545, %v1313
      %1547 = vst.msk [vmem:[#allocation3 + $0x8] sm:$0xff] %vm1545, %v1314
      %1548 = vst.msk [vmem:[#allocation3 + $0x10] sm:$0xff] %vm1545, %v1315
      %1549 = vst.msk [vmem:[#allocation3 + $0x18] sm:$0xff] %vm1545, %v1316
      %1550 = vst.msk [vmem:[#allocation3 + $0x20] sm:$0xff] %vm1545, %v1317
      %1551 = vst.msk [vmem:[#allocation3 + $0x28] sm:$0xff] %vm1545, %v1318
      %1552 = vst.msk [vmem:[#allocation3 + $0x30] sm:$0xff] %vm1545, %v1319
      %1553 = vst.msk [vmem:[#allocation3 + $0x38] sm:$0xff] %vm1545, %v1320
      %1554 = vst.msk [vmem:[#allocation3 + $0x40] sm:$0xff] %vm1545, %v1321
      %1555 = vst.msk [vmem:[#allocation3 + $0x48] sm:$0xff] %vm1545, %v1322
      %1556 = vst.msk [vmem:[#allocation3 + $0x50] sm:$0xff] %vm1545, %v1323
      %1557 = vst.msk [vmem:[#allocation3 + $0x58] sm:$0xff] %vm1545, %v1324
      %1558 = vst.msk [vmem:[#allocation3 + $0x60] sm:$0xff] %vm1545, %v1325
      %1559 = vst.msk [vmem:[#allocation3 + $0x68] sm:$0xff] %vm1545, %v1326
      %1560 = vst.msk [vmem:[#allocation3 + $0x70] sm:$0xff] %vm1545, %v1327
      %1561 = vst.msk [vmem:[#allocation3 + $0x78] sm:$0xff] %vm1545, %v1328
      %v1562 = vld [vmem:[#allocation4] sm:$0xff]
      %v1563 = vld [vmem:[#allocation4 + $0x8] sm:$0xff]
      %v1564 = vld [vmem:[#allocation4 + $0x10] sm:$0xff]
      %v1565 = vld [vmem:[#allocation4 + $0x18] sm:$0xff]
      %v1566 = vld [vmem:[#allocation4 + $0x20] sm:$0xff]
      %v1567 = vld [vmem:[#allocation4 + $0x28] sm:$0xff]
      %v1568 = vld [vmem:[#allocation4 + $0x30] sm:$0xff]
      %v1569 = vld [vmem:[#allocation4 + $0x38] sm:$0xff]
      %v1570 = vld [vmem:[#allocation4 + $0x40] sm:$0xff]
      %v1571 = vld [vmem:[#allocation4 + $0x48] sm:$0xff]
      %v1572 = vld [vmem:[#allocation4 + $0x50] sm:$0xff]
      %v1573 = vld [vmem:[#allocation4 + $0x58] sm:$0xff]
      %v1574 = vld [vmem:[#allocation4 + $0x60] sm:$0xff]
      %v1575 = vld [vmem:[#allocation4 + $0x68] sm:$0xff]
      %v1576 = vld [vmem:[#allocation4 + $0x70] sm:$0xff]
      %v1577 = vld [vmem:[#allocation4 + $0x78] sm:$0xff]
      %v1578 = vmul.f32 %v1346, %v1562
      %v1579 = vmul.f32 %v1348, %v1563
      %v1580 = vmul.f32 %v1350, %v1564
      %v1581 = vmul.f32 %v1352, %v1565
      %v1582 = vmul.f32 %v1354, %v1566
      %v1583 = vmul.f32 %v1356, %v1567
      %v1584 = vmul.f32 %v1358, %v1568
      %v1585 = vmul.f32 %v1360, %v1569
      %v1586 = vmul.f32 %v1362, %v1570
      %v1587 = vmul.f32 %v1364, %v1571
      %v1588 = vmul.f32 %v1366, %v1572
      %v1589 = vmul.f32 %v1368, %v1573
      %v1590 = vmul.f32 %v1370, %v1574
      %v1591 = vmul.f32 %v1372, %v1575
      %v1592 = vmul.f32 %v1374, %v1576
      %v1593 = vmul.f32 %v1376, %v1577
      %v1594 = vadd.f32 %v1578, %v1506
      %v1595 = vadd.f32 %v1579, %v1508
      %v1596 = vadd.f32 %v1580, %v1510
      %v1597 = vadd.f32 %v1581, %v1512
      %v1598 = vadd.f32 %v1582, %v1514
      %v1599 = vadd.f32 %v1583, %v1516
      %v1600 = vadd.f32 %v1584, %v1518
      %v1601 = vadd.f32 %v1585, %v1520
      %v1602 = vadd.f32 %v1586, %v1522
      %v1603 = vadd.f32 %v1587, %v1524
      %v1604 = vadd.f32 %v1588, %v1526
      %v1605 = vadd.f32 %v1589, %v1528
      %v1606 = vadd.f32 %v1590, %v1530
      %v1607 = vadd.f32 %v1591, %v1532
      %v1608 = vadd.f32 %v1592, %v1534
      %v1609 = vadd.f32 %v1593, %v1536
      %1610 = vst.msk [vmem:[#allocation4] sm:$0xff] %vm1545, %v1594
      %1611 = vst.msk [vmem:[#allocation4 + $0x8] sm:$0xff] %vm1545, %v1595
      %1612 = vst.msk [vmem:[#allocation4 + $0x10] sm:$0xff] %vm1545, %v1596
      %1613 = vst.msk [vmem:[#allocation4 + $0x18] sm:$0xff] %vm1545, %v1597
      %1614 = vst.msk [vmem:[#allocation4 + $0x20] sm:$0xff] %vm1545, %v1598
      %1615 = vst.msk [vmem:[#allocation4 + $0x28] sm:$0xff] %vm1545, %v1599
      %1616 = vst.msk [vmem:[#allocation4 + $0x30] sm:$0xff] %vm1545, %v1600
      %1617 = vst.msk [vmem:[#allocation4 + $0x38] sm:$0xff] %vm1545, %v1601
      %1618 = vst.msk [vmem:[#allocation4 + $0x40] sm:$0xff] %vm1545, %v1602
      %1619 = vst.msk [vmem:[#allocation4 + $0x48] sm:$0xff] %vm1545, %v1603
      %1620 = vst.msk [vmem:[#allocation4 + $0x50] sm:$0xff] %vm1545, %v1604
      %1621 = vst.msk [vmem:[#allocation4 + $0x58] sm:$0xff] %vm1545, %v1605
      %1622 = vst.msk [vmem:[#allocation4 + $0x60] sm:$0xff] %vm1545, %v1606
      %1623 = vst.msk [vmem:[#allocation4 + $0x68] sm:$0xff] %vm1545, %v1607
      %1624 = vst.msk [vmem:[#allocation4 + $0x70] sm:$0xff] %vm1545, %v1608
      %1625 = vst.msk [vmem:[#allocation4 + $0x78] sm:$0xff] %vm1545, %v1609
      %v1626 = vld [vmem:[#allocation5] sm:$0xff]
      %v1627 = vld [vmem:[#allocation5 + $0x8] sm:$0xff]
      %v1628 = vld [vmem:[#allocation5 + $0x10] sm:$0xff]
      %v1629 = vld [vmem:[#allocation5 + $0x18] sm:$0xff]
      %v1630 = vld [vmem:[#allocation5 + $0x20] sm:$0xff]
      %v1631 = vld [vmem:[#allocation5 + $0x28] sm:$0xff]
      %v1632 = vld [vmem:[#allocation5 + $0x30] sm:$0xff]
      %v1633 = vld [vmem:[#allocation5 + $0x38] sm:$0xff]
      %v1634 = vld [vmem:[#allocation5 + $0x40] sm:$0xff]
      %v1635 = vld [vmem:[#allocation5 + $0x48] sm:$0xff]
      %v1636 = vld [vmem:[#allocation5 + $0x50] sm:$0xff]
      %v1637 = vld [vmem:[#allocation5 + $0x58] sm:$0xff]
      %v1638 = vld [vmem:[#allocation5 + $0x60] sm:$0xff]
      %v1639 = vld [vmem:[#allocation5 + $0x68] sm:$0xff]
      %v1640 = vld [vmem:[#allocation5 + $0x70] sm:$0xff]
      %v1641 = vld [vmem:[#allocation5 + $0x78] sm:$0xff]
      %1643 = vset.pattern.permute.xlu0 0
      %1644 = vperm.xlu0 %1643, %v1346
      %v1645 = vpop.permute.xlu0 %1644
      %1648 = vset.pattern.permute.xlu0 0
      %1649 = vperm.xlu0 %1648, %v1348
      %v1650 = vpop.permute.xlu0 %1649
      %1653 = vset.pattern.permute.xlu0 0
      %1654 = vperm.xlu0 %1653, %v1350
      %v1655 = vpop.permute.xlu0 %1654
      %1658 = vset.pattern.permute.xlu0 0
      %1659 = vperm.xlu0 %1658, %v1352
      %v1660 = vpop.permute.xlu0 %1659
      %1663 = vset.pattern.permute.xlu0 0
      %1664 = vperm.xlu0 %1663, %v1354
      %v1665 = vpop.permute.xlu0 %1664
      %1668 = vset.pattern.permute.xlu0 0
      %1669 = vperm.xlu0 %1668, %v1356
      %v1670 = vpop.permute.xlu0 %1669
      %1673 = vset.pattern.permute.xlu0 0
      %1674 = vperm.xlu0 %1673, %v1358
      %v1675 = vpop.permute.xlu0 %1674
      %1678 = vset.pattern.permute.xlu0 0
      %1679 = vperm.xlu0 %1678, %v1360
      %v1680 = vpop.permute.xlu0 %1679
      %1683 = vset.pattern.permute.xlu0 0
      %1684 = vperm.xlu0 %1683, %v1362
      %v1685 = vpop.permute.xlu0 %1684
      %1688 = vset.pattern.permute.xlu0 0
      %1689 = vperm.xlu0 %1688, %v1364
      %v1690 = vpop.permute.xlu0 %1689
      %1693 = vset.pattern.permute.xlu0 0
      %1694 = vperm.xlu0 %1693, %v1366
      %v1695 = vpop.permute.xlu0 %1694
      %1698 = vset.pattern.permute.xlu0 0
      %1699 = vperm.xlu0 %1698, %v1368
      %v1700 = vpop.permute.xlu0 %1699
      %1703 = vset.pattern.permute.xlu0 0
      %1704 = vperm.xlu0 %1703, %v1370
      %v1705 = vpop.permute.xlu0 %1704
      %1708 = vset.pattern.permute.xlu0 0
      %1709 = vperm.xlu0 %1708, %v1372
      %v1710 = vpop.permute.xlu0 %1709
      %1713 = vset.pattern.permute.xlu0 0
      %1714 = vperm.xlu0 %1713, %v1374
      %v1715 = vpop.permute.xlu0 %1714
      %1718 = vset.pattern.permute.xlu0 0
      %1719 = vperm.xlu0 %1718, %v1376
      %v1720 = vpop.permute.xlu0 %1719
      %v1722 = vmul.f32 %v1645, %v1626
      %v1723 = vmul.f32 %v1650, %v1627
      %v1724 = vmul.f32 %v1655, %v1628
      %v1725 = vmul.f32 %v1660, %v1629
      %v1726 = vmul.f32 %v1665, %v1630
      %v1727 = vmul.f32 %v1670, %v1631
      %v1728 = vmul.f32 %v1675, %v1632
      %v1729 = vmul.f32 %v1680, %v1633
      %v1730 = vmul.f32 %v1685, %v1634
      %v1731 = vmul.f32 %v1690, %v1635
      %v1732 = vmul.f32 %v1695, %v1636
      %v1733 = vmul.f32 %v1700, %v1637
      %v1734 = vmul.f32 %v1705, %v1638
      %v1735 = vmul.f32 %v1710, %v1639
      %v1736 = vmul.f32 %v1715, %v1640
      %v1737 = vmul.f32 %v1720, %v1641
      %1738 = vmatprep.subr.bf16.mxu0 0
      %1739 = vmatpush1.bf16.msra.mxu0 %v1105
      %1740 = vmatprep.subr.bf16.mxu0 0
      %1741 = vmatpush1.bf16.msra.mxu0 %v1106
      %1742 = vmatprep.subr.bf16.mxu0 0
      %1743 = vmatpush1.bf16.msra.mxu0 %v1107
      %1744 = vmatprep.subr.bf16.mxu0 0
      %1745 = vmatpush1.bf16.msra.mxu0 %v1108
      %1746 = vmatprep.subr.bf16.mxu0 0
      %1747 = vmatpush1.bf16.msra.mxu0 %v1109
      %1748 = vmatprep.subr.bf16.mxu0 0
      %1749 = vmatpush1.bf16.msra.mxu0 %v1110
      %1750 = vmatprep.subr.bf16.mxu0 0
      %1751 = vmatpush1.bf16.msra.mxu0 %v1111
      %1752 = vmatprep.subr.bf16.mxu0 0
      %1753 = vmatpush1.bf16.msra.mxu0 %v1112
      %1754 = vmatprep.subr.bf16.mxu0 0
      %1755 = vmatpush1.bf16.msra.mxu0 0
      %1756 = vmatprep.subr.bf16.mxu0 0
      %1757 = vmatpush1.bf16.msra.mxu0 0
      %1758 = vmatprep.subr.bf16.mxu0 0
      %1759 = vmatpush1.bf16.msra.mxu0 0
      %1760 = vmatprep.subr.bf16.mxu0 0
      %1761 = vmatpush1.bf16.msra.mxu0 0
      %1762 = vmatprep.subr.bf16.mxu0 0
      %1763 = vmatpush1.bf16.msra.mxu0 0
      %1764 = vmatprep.subr.bf16.mxu0 0
      %1765 = vmatpush1.bf16.msra.mxu0 0
      %1766 = vmatprep.subr.bf16.mxu0 0
      %1767 = vmatpush1.bf16.msra.mxu0 0
      %1768 = vmatprep.subr.bf16.mxu0 0
      %1769 = vmatpush1.bf16.msra.mxu0 0
      %1770 = vmatprep.mubr.bf16.mxu0 0
      %1771 = vmatmul.mubr.bf16.gmra.mrb[0].mxu0 %v1537
      %v1772 = vpop.f32.mrb[0].mxu0
      %v1773 = vadd.f32 0.0, %v1772
      %v1774 = vpop.f32.mrb[0].mxu0
      %v1775 = vpop.f32.mrb[0].mxu0
      %v1776 = vadd.f32 0.0, %v1775
      %v1777 = vpop.f32.mrb[0].mxu0
      %1778 = vmatprep.mubr.bf16.mxu0 0
      %1779 = vmatmul.mubr.bf16.gmra.mrb[0].mxu0 %v1538
      %v1780 = vpop.f32.mrb[0].mxu0
      %v1781 = vadd.f32 0.0, %v1780
      %v1782 = vpop.f32.mrb[0].mxu0
      %v1783 = vpop.f32.mrb[0].mxu0
      %v1784 = vadd.f32 0.0, %v1783
      %v1785 = vpop.f32.mrb[0].mxu0
      %1786 = vmatprep.mubr.bf16.mxu0 0
      %1787 = vmatmul.mubr.bf16.gmra.mrb[0].mxu0 %v1539
      %v1788 = vpop.f32.mrb[0].mxu0
      %v1789 = vadd.f32 0.0, %v1788
      %v1790 = vpop.f32.mrb[0].mxu0
      %v1791 = vpop.f32.mrb[0].mxu0
      %v1792 = vadd.f32 0.0, %v1791
      %v1793 = vpop.f32.mrb[0].mxu0
      %1794 = vmatprep.mubr.bf16.mxu0 0
      %1795 = vmatmul.mubr.bf16.gmra.mrb[0].mxu0 %v1540
      %v1796 = vpop.f32.mrb[0].mxu0
      %v1797 = vadd.f32 0.0, %v1796
      %v1798 = vpop.f32.mrb[0].mxu0
      %v1799 = vpop.f32.mrb[0].mxu0
      %v1800 = vadd.f32 0.0, %v1799
      %v1801 = vpop.f32.mrb[0].mxu0
      %1802 = vmatprep.mubr.bf16.mxu0 0
      %1803 = vmatmul.mubr.bf16.gmra.mrb[0].mxu0 %v1541
      %v1804 = vpop.f32.mrb[0].mxu0
      %v1805 = vadd.f32 0.0, %v1804
      %v1806 = vpop.f32.mrb[0].mxu0
      %v1807 = vpop.f32.mrb[0].mxu0
      %v1808 = vadd.f32 0.0, %v1807
      %v1809 = vpop.f32.mrb[0].mxu0
      %1810 = vmatprep.mubr.bf16.mxu0 0
      %1811 = vmatmul.mubr.bf16.gmra.mrb[0].mxu0 %v1542
      %v1812 = vpop.f32.mrb[0].mxu0
      %v1813 = vadd.f32 0.0, %v1812
      %v1814 = vpop.f32.mrb[0].mxu0
      %v1815 = vpop.f32.mrb[0].mxu0
      %v1816 = vadd.f32 0.0, %v1815
      %v1817 = vpop.f32.mrb[0].mxu0
      %1818 = vmatprep.mubr.bf16.mxu0 0
      %1819 = vmatmul.mubr.bf16.gmra.mrb[0].mxu0 %v1543
      %v1820 = vpop.f32.mrb[0].mxu0
      %v1821 = vadd.f32 0.0, %v1820
      %v1822 = vpop.f32.mrb[0].mxu0
      %v1823 = vpop.f32.mrb[0].mxu0
      %v1824 = vadd.f32 0.0, %v1823
      %v1825 = vpop.f32.mrb[0].mxu0
      %1826 = vmatprep.mubr.bf16.mxu0 0
      %1827 = vmatmul.mubr.bf16.gmra.mrb[0].mxu0 %v1544
      %v1828 = vpop.f32.mrb[0].mxu0
      %v1829 = vadd.f32 0.0, %v1828
      %v1830 = vpop.f32.mrb[0].mxu0
      %v1831 = vpop.f32.mrb[0].mxu0
      %v1832 = vadd.f32 0.0, %v1831
      %v1833 = vpop.f32.mrb[0].mxu0
      %1834 = vdwg.mxu0
      %v1835 = vadd.f32 %v1722, %v1773
      %v1836 = vadd.f32 %v1723, %v1776
      %v1837 = vadd.f32 %v1724, %v1781
      %v1838 = vadd.f32 %v1725, %v1784
      %v1839 = vadd.f32 %v1726, %v1789
      %v1840 = vadd.f32 %v1727, %v1792
      %v1841 = vadd.f32 %v1728, %v1797
      %v1842 = vadd.f32 %v1729, %v1800
      %v1843 = vadd.f32 %v1730, %v1805
      %v1844 = vadd.f32 %v1731, %v1808
      %v1845 = vadd.f32 %v1732, %v1813
      %v1846 = vadd.f32 %v1733, %v1816
      %v1847 = vadd.f32 %v1734, %v1821
      %v1848 = vadd.f32 %v1735, %v1824
      %v1849 = vadd.f32 %v1736, %v1829
      %v1850 = vadd.f32 %v1737, %v1832
      %1851 = vst.msk [vmem:[#allocation5] sm:$0xff] %vm1121, %v1835
      %1852 = vst.msk [vmem:[#allocation5 + $0x8] sm:$0xff] %vm1121, %v1836
      %1853 = vst.msk [vmem:[#allocation5 + $0x10] sm:$0xff] %vm1121, %v1837
      %1854 = vst.msk [vmem:[#allocation5 + $0x18] sm:$0xff] %vm1121, %v1838
      %1855 = vst.msk [vmem:[#allocation5 + $0x20] sm:$0xff] %vm1121, %v1839
      %1856 = vst.msk [vmem:[#allocation5 + $0x28] sm:$0xff] %vm1121, %v1840
      %1857 = vst.msk [vmem:[#allocation5 + $0x30] sm:$0xff] %vm1121, %v1841
      %1858 = vst.msk [vmem:[#allocation5 + $0x38] sm:$0xff] %vm1121, %v1842
      %1859 = vst.msk [vmem:[#allocation5 + $0x40] sm:$0xff] %vm1121, %v1843
      %1860 = vst.msk [vmem:[#allocation5 + $0x48] sm:$0xff] %vm1121, %v1844
      %1861 = vst.msk [vmem:[#allocation5 + $0x50] sm:$0xff] %vm1121, %v1845
      %1862 = vst.msk [vmem:[#allocation5 + $0x58] sm:$0xff] %vm1121, %v1846
      %1863 = vst.msk [vmem:[#allocation5 + $0x60] sm:$0xff] %vm1121, %v1847
      %1864 = vst.msk [vmem:[#allocation5 + $0x68] sm:$0xff] %vm1121, %v1848
      %1865 = vst.msk [vmem:[#allocation5 + $0x70] sm:$0xff] %vm1121, %v1849
      %1866 = vst.msk [vmem:[#allocation5 + $0x78] sm:$0xff] %vm1121, %v1850
      // Predicated region
      $region57: #{tpu_custom_call.1} parent=51 // pred_check
        %p1867 = pneg %p498
      $region58: #{tpu_custom_call.1} parent=51 // pred_check_branch
        %1869 = sbr.rel (%p1867) target = $region60
      $region59: #{tpu_custom_call.1} parent=51 // pred_region
        %v1870 = vld [vmem:[#allocation5] sm:$0xff]
        %v1871 = vld [vmem:[#allocation5 + $0x8] sm:$0xff]
        %v1872 = vld [vmem:[#allocation5 + $0x10] sm:$0xff]
        %v1873 = vld [vmem:[#allocation5 + $0x18] sm:$0xff]
        %v1874 = vld [vmem:[#allocation5 + $0x20] sm:$0xff]
        %v1875 = vld [vmem:[#allocation5 + $0x28] sm:$0xff]
        %v1876 = vld [vmem:[#allocation5 + $0x30] sm:$0xff]
        %v1877 = vld [vmem:[#allocation5 + $0x38] sm:$0xff]
        %v1878 = vld [vmem:[#allocation5 + $0x40] sm:$0xff]
        %v1879 = vld [vmem:[#allocation5 + $0x48] sm:$0xff]
        %v1880 = vld [vmem:[#allocation5 + $0x50] sm:$0xff]
        %v1881 = vld [vmem:[#allocation5 + $0x58] sm:$0xff]
        %v1882 = vld [vmem:[#allocation5 + $0x60] sm:$0xff]
        %v1883 = vld [vmem:[#allocation5 + $0x68] sm:$0xff]
        %v1884 = vld [vmem:[#allocation5 + $0x70] sm:$0xff]
        %v1885 = vld [vmem:[#allocation5 + $0x78] sm:$0xff]
        %v1886 = vld [vmem:[#allocation4] sm:$0xff]
        %v1887 = vld [vmem:[#allocation4 + $0x8] sm:$0xff]
        %v1888 = vld [vmem:[#allocation4 + $0x10] sm:$0xff]
        %v1889 = vld [vmem:[#allocation4 + $0x18] sm:$0xff]
        %v1890 = vld [vmem:[#allocation4 + $0x20] sm:$0xff]
        %v1891 = vld [vmem:[#allocation4 + $0x28] sm:$0xff]
        %v1892 = vld [vmem:[#allocation4 + $0x30] sm:$0xff]
        %v1893 = vld [vmem:[#allocation4 + $0x38] sm:$0xff]
        %v1894 = vld [vmem:[#allocation4 + $0x40] sm:$0xff]
        %v1895 = vld [vmem:[#allocation4 + $0x48] sm:$0xff]
        %v1896 = vld [vmem:[#allocation4 + $0x50] sm:$0xff]
        %v1897 = vld [vmem:[#allocation4 + $0x58] sm:$0xff]
        %v1898 = vld [vmem:[#allocation4 + $0x60] sm:$0xff]
        %v1899 = vld [vmem:[#allocation4 + $0x68] sm:$0xff]
        %v1900 = vld [vmem:[#allocation4 + $0x70] sm:$0xff]
        %v1901 = vld [vmem:[#allocation4 + $0x78] sm:$0xff]
        %v1902 = vrcp.pop %v1886
        %v1903 = vrcp.pop %v1887
        %v1904 = vrcp.pop %v1888
        %v1905 = vrcp.pop %v1889
        %v1906 = vrcp.pop %v1890
        %v1907 = vrcp.pop %v1891
        %v1908 = vrcp.pop %v1892
        %v1909 = vrcp.pop %v1893
        %v1910 = vrcp.pop %v1894
        %v1911 = vrcp.pop %v1895
        %v1912 = vrcp.pop %v1896
        %v1913 = vrcp.pop %v1897
        %v1914 = vrcp.pop %v1898
        %v1915 = vrcp.pop %v1899
        %v1916 = vrcp.pop %v1900
        %v1917 = vrcp.pop %v1901
        %1919 = vset.pattern.permute.xlu0 0
        %1920 = vperm.xlu0 %1919, %v1902
        %v1921 = vpop.permute.xlu0 %1920
        %1924 = vset.pattern.permute.xlu0 0
        %1925 = vperm.xlu0 %1924, %v1903
        %v1926 = vpop.permute.xlu0 %1925
        %1929 = vset.pattern.permute.xlu0 0
        %1930 = vperm.xlu0 %1929, %v1904
        %v1931 = vpop.permute.xlu0 %1930
        %1934 = vset.pattern.permute.xlu0 0
        %1935 = vperm.xlu0 %1934, %v1905
        %v1936 = vpop.permute.xlu0 %1935
        %1939 = vset.pattern.permute.xlu0 0
        %1940 = vperm.xlu0 %1939, %v1906
        %v1941 = vpop.permute.xlu0 %1940
        %1944 = vset.pattern.permute.xlu0 0
        %1945 = vperm.xlu0 %1944, %v1907
        %v1946 = vpop.permute.xlu0 %1945
        %1949 = vset.pattern.permute.xlu0 0
        %1950 = vperm.xlu0 %1949, %v1908
        %v1951 = vpop.permute.xlu0 %1950
        %1954 = vset.pattern.permute.xlu0 0
        %1955 = vperm.xlu0 %1954, %v1909
        %v1956 = vpop.permute.xlu0 %1955
        %1959 = vset.pattern.permute.xlu0 0
        %1960 = vperm.xlu0 %1959, %v1910
        %v1961 = vpop.permute.xlu0 %1960
        %1964 = vset.pattern.permute.xlu0 0
        %1965 = vperm.xlu0 %1964, %v1911
        %v1966 = vpop.permute.xlu0 %1965
        %1969 = vset.pattern.permute.xlu0 0
        %1970 = vperm.xlu0 %1969, %v1912
        %v1971 = vpop.permute.xlu0 %1970
        %1974 = vset.pattern.permute.xlu0 0
        %1975 = vperm.xlu0 %1974, %v1913
        %v1976 = vpop.permute.xlu0 %1975
        %1979 = vset.pattern.permute.xlu0 0
        %1980 = vperm.xlu0 %1979, %v1914
        %v1981 = vpop.permute.xlu0 %1980
        %1984 = vset.pattern.permute.xlu0 0
        %1985 = vperm.xlu0 %1984, %v1915
        %v1986 = vpop.permute.xlu0 %1985
        %1989 = vset.pattern.permute.xlu0 0
        %1990 = vperm.xlu0 %1989, %v1916
        %v1991 = vpop.permute.xlu0 %1990
        %1994 = vset.pattern.permute.xlu0 0
        %1995 = vperm.xlu0 %1994, %v1917
        %v1996 = vpop.permute.xlu0 %1995
        %v1998 = vmul.f32 %v1870, %v1921
        %v1999 = vmul.f32 %v1871, %v1926
        %v2000 = vmul.f32 %v1872, %v1931
        %v2001 = vmul.f32 %v1873, %v1936
        %v2002 = vmul.f32 %v1874, %v1941
        %v2003 = vmul.f32 %v1875, %v1946
        %v2004 = vmul.f32 %v1876, %v1951
        %v2005 = vmul.f32 %v1877, %v1956
        %v2006 = vmul.f32 %v1878, %v1961
        %v2007 = vmul.f32 %v1879, %v1966
        %v2008 = vmul.f32 %v1880, %v1971
        %v2009 = vmul.f32 %v1881, %v1976
        %v2010 = vmul.f32 %v1882, %v1981
        %v2011 = vmul.f32 %v1883, %v1986
        %v2012 = vmul.f32 %v1884, %v1991
        %v2013 = vmul.f32 %v1885, %v1996
        %v2014 = vld [vmem:[%s486] sm:$0xff]
        %v2015 = vld [vmem:[%s486 + $0x8] sm:$0xff]
        %v2016 = vld [vmem:[%s486 + $0x10] sm:$0xff]
        %v2017 = vld [vmem:[%s486 + $0x18] sm:$0xff]
        %v2019 = vsel %vm1121, %v1998, 0
        %v2022 = vsel %vm1121, %v1999, 0
        %v2025 = vsel %vm1121, %v2000, 0
        %v2028 = vsel %vm1121, %v2001, 0
        %v2031 = vsel %vm1121, %v2002, 0
        %v2034 = vsel %vm1121, %v2003, 0
        %v2037 = vsel %vm1121, %v2004, 0
        %v2040 = vsel %vm1121, %v2005, 0
        %v2043 = vsel %vm1121, %v2006, 0
        %v2046 = vsel %vm1121, %v2007, 0
        %v2049 = vsel %vm1121, %v2008, 0
        %v2052 = vsel %vm1121, %v2009, 0
        %v2055 = vsel %vm1121, %v2010, 0
        %v2058 = vsel %vm1121, %v2011, 0
        %v2061 = vsel %vm1121, %v2012, 0
        %v2064 = vsel %vm1121, %v2013, 0
        %2066 = vmatprep.subr.mxu0 0.0
        %2067 = vmatpush1.msra.mxu0 %v2014
        %2068 = vmatprep.subr.mxu0 0.0
        %2069 = vmatpush1.msra.mxu0 %v2015
        %2070 = vmatprep.subr.mxu0 0.0
        %2071 = vmatpush1.msra.mxu0 %v2016
        %2072 = vmatprep.subr.mxu0 0.0
        %2073 = vmatpush1.msra.mxu0 %v2017
        %2074 = vmatprep.subr.mxu0 0.0
        %2075 = vmatpush1.msra.mxu0 0.0
        %2076 = vmatprep.subr.mxu0 0.0
        %2077 = vmatpush1.msra.mxu0 0.0
        %2078 = vmatprep.subr.mxu0 0.0
        %2079 = vmatpush1.msra.mxu0 0.0
        %2080 = vmatprep.subr.mxu0 0.0
        %2081 = vmatpush1.msra.mxu0 0.0
        %2082 = vmatprep.subr.mxu0 0.0
        %2083 = vmatpush1.msra.mxu0 0.0
        %2084 = vmatprep.subr.mxu0 0.0
        %2085 = vmatpush1.msra.mxu0 0.0
        %2086 = vmatprep.subr.mxu0 0.0
        %2087 = vmatpush1.msra.mxu0 0.0
        %2088 = vmatprep.subr.mxu0 0.0
        %2089 = vmatpush1.msra.mxu0 0.0
        %2090 = vmatprep.subr.mxu0 0.0
        %2091 = vmatpush1.msra.mxu0 0.0
        %2092 = vmatprep.subr.mxu0 0.0
        %2093 = vmatpush1.msra.mxu0 0.0
        %2094 = vmatprep.subr.mxu0 0.0
        %2095 = vmatpush1.msra.mxu0 0.0
        %2096 = vmatprep.subr.mxu0 0.0
        %2097 = vmatpush1.msra.mxu0 0.0
        %2098 = vmatprep.subr.mxu0 0.0
        %2099 = vmatpush1.msra.mxu0 0.0
        %2100 = vmatprep.subr.mxu0 0.0
        %2101 = vmatpush1.msra.mxu0 0.0
        %2102 = vmatprep.subr.mxu0 0.0
        %2103 = vmatpush1.msra.mxu0 0.0
        %2104 = vmatprep.subr.mxu0 0.0
        %2105 = vmatpush1.msra.mxu0 0.0
        %2106 = vmatprep.subr.mxu0 0.0
        %2107 = vmatpush1.msra.mxu0 0.0
        %2108 = vmatprep.subr.mxu0 0.0
        %2109 = vmatpush1.msra.mxu0 0.0
        %2110 = vmatprep.subr.mxu0 0.0
        %2111 = vmatpush1.msra.mxu0 0.0
        %2112 = vmatprep.subr.mxu0 0.0
        %2113 = vmatpush1.msra.mxu0 0.0
        %2114 = vmatprep.subr.mxu0 0.0
        %2115 = vmatpush1.msra.mxu0 0.0
        %2116 = vmatprep.subr.mxu0 0.0
        %2117 = vmatpush1.msra.mxu0 0.0
        %2118 = vmatprep.subr.mxu0 0.0
        %2119 = vmatpush1.msra.mxu0 0.0
        %2120 = vmatprep.subr.mxu0 0.0
        %2121 = vmatpush1.msra.mxu0 0.0
        %2122 = vmatprep.subr.mxu0 0.0
        %2123 = vmatpush1.msra.mxu0 0.0
        %2124 = vmatprep.subr.mxu0 0.0
        %2125 = vmatpush1.msra.mxu0 0.0
        %2126 = vmatprep.subr.mxu0 0.0
        %2127 = vmatpush1.msra.mxu0 0.0
        %2128 = vmatprep.subr.mxu0 0.0
        %2129 = vmatpush1.msra.mxu0 0.0
        %2130 = vmatprep.mubr.f32.mxu0 0.0
        %2131 = vmatmul.mubr.f32.gmra.mrb[0].mxu0 %v2019
        %v2132 = vpop.f32.mrb[0].mxu0
        %v2133 = vadd.f32 0.0, %v2132
        %v2134 = vpop.f32.mrb[0].mxu0
        %2135 = vmatprep.mubr.f32.mxu0 0.0
        %2136 = vmatmul.mubr.f32.gmra.mrb[0].mxu0 %v2022
        %v2137 = vpop.f32.mrb[0].mxu0
        %v2138 = vadd.f32 0.0, %v2137
        %v2139 = vpop.f32.mrb[0].mxu0
        %2140 = vmatprep.mubr.f32.mxu0 0.0
        %2141 = vmatmul.mubr.f32.gmra.mrb[0].mxu0 %v2025
        %v2142 = vpop.f32.mrb[0].mxu0
        %v2143 = vadd.f32 0.0, %v2142
        %v2144 = vpop.f32.mrb[0].mxu0
        %2145 = vmatprep.mubr.f32.mxu0 0.0
        %2146 = vmatmul.mubr.f32.gmra.mrb[0].mxu0 %v2028
        %v2147 = vpop.f32.mrb[0].mxu0
        %v2148 = vadd.f32 0.0, %v2147
        %v2149 = vpop.f32.mrb[0].mxu0
        %2150 = vmatprep.mubr.f32.mxu0 0.0
        %2151 = vmatmul.mubr.f32.gmra.mrb[0].mxu0 %v2031
        %v2152 = vpop.f32.mrb[0].mxu0
        %v2153 = vadd.f32 0.0, %v2152
        %v2154 = vpop.f32.mrb[0].mxu0
        %2155 = vmatprep.mubr.f32.mxu0 0.0
        %2156 = vmatmul.mubr.f32.gmra.mrb[0].mxu0 %v2034
        %v2157 = vpop.f32.mrb[0].mxu0
        %v2158 = vadd.f32 0.0, %v2157
        %v2159 = vpop.f32.mrb[0].mxu0
        %2160 = vmatprep.mubr.f32.mxu0 0.0
        %2161 = vmatmul.mubr.f32.gmra.mrb[0].mxu0 %v2037
        %v2162 = vpop.f32.mrb[0].mxu0
        %v2163 = vadd.f32 0.0, %v2162
        %v2164 = vpop.f32.mrb[0].mxu0
        %2165 = vmatprep.mubr.f32.mxu0 0.0
        %2166 = vmatmul.mubr.f32.gmra.mrb[0].mxu0 %v2040
        %v2167 = vpop.f32.mrb[0].mxu0
        %v2168 = vadd.f32 0.0, %v2167
        %v2169 = vpop.f32.mrb[0].mxu0
        %2170 = vmatprep.mubr.f32.mxu0 0.0
        %2171 = vmatmul.mubr.f32.gmra.mrb[0].mxu0 %v2043
        %v2172 = vpop.f32.mrb[0].mxu0
        %v2173 = vadd.f32 0.0, %v2172
        %v2174 = vpop.f32.mrb[0].mxu0
        %2175 = vmatprep.mubr.f32.mxu0 0.0
        %2176 = vmatmul.mubr.f32.gmra.mrb[0].mxu0 %v2046
        %v2177 = vpop.f32.mrb[0].mxu0
        %v2178 = vadd.f32 0.0, %v2177
        %v2179 = vpop.f32.mrb[0].mxu0
        %2180 = vmatprep.mubr.f32.mxu0 0.0
        %2181 = vmatmul.mubr.f32.gmra.mrb[0].mxu0 %v2049
        %v2182 = vpop.f32.mrb[0].mxu0
        %v2183 = vadd.f32 0.0, %v2182
        %v2184 = vpop.f32.mrb[0].mxu0
        %2185 = vmatprep.mubr.f32.mxu0 0.0
        %2186 = vmatmul.mubr.f32.gmra.mrb[0].mxu0 %v2052
        %v2187 = vpop.f32.mrb[0].mxu0
        %v2188 = vadd.f32 0.0, %v2187
        %v2189 = vpop.f32.mrb[0].mxu0
        %2190 = vmatprep.mubr.f32.mxu0 0.0
        %2191 = vmatmul.mubr.f32.gmra.mrb[0].mxu0 %v2055
        %v2192 = vpop.f32.mrb[0].mxu0
        %v2193 = vadd.f32 0.0, %v2192
        %v2194 = vpop.f32.mrb[0].mxu0
        %2195 = vmatprep.mubr.f32.mxu0 0.0
        %2196 = vmatmul.mubr.f32.gmra.mrb[0].mxu0 %v2058
        %v2197 = vpop.f32.mrb[0].mxu0
        %v2198 = vadd.f32 0.0, %v2197
        %v2199 = vpop.f32.mrb[0].mxu0
        %2200 = vmatprep.mubr.f32.mxu0 0.0
        %2201 = vmatmul.mubr.f32.gmra.mrb[0].mxu0 %v2061
        %v2202 = vpop.f32.mrb[0].mxu0
        %v2203 = vadd.f32 0.0, %v2202
        %v2204 = vpop.f32.mrb[0].mxu0
        %2205 = vmatprep.mubr.f32.mxu0 0.0
        %2206 = vmatmul.mubr.f32.gmra.mrb[0].mxu0 %v2064
        %v2207 = vpop.f32.mrb[0].mxu0
        %v2208 = vadd.f32 0.0, %v2207
        %v2209 = vpop.f32.mrb[0].mxu0
        %2210 = vdwg.mxu0
        %p2211 = scmp.eq.s32.totalorder %s27, 0
        // Predicated region
        $region61: #{tpu_custom_call.1} parent=59 // pred_check
          %p2212 = pneg %p2211
        $region62: #{tpu_custom_call.1} parent=59 // pred_check_branch
          %2214 = sbr.rel (%p2212) target = $region64
        $region63: #{tpu_custom_call.1} parent=59 // pred_region
          %v2215 = vld [vmem:[%s7] sm:$0x1]
          %v2217 = vlaneseq
          %v2218 = vshrl.u32 %v2217, 7
          %v2219 = vsub.s32 0, %v2218
          %v2220 = vrot.slane %v2215, %v2219
          %v2222 = vadd.f32 %v2133, %v2220
          %v2223 = vadd.f32 %v2138, %v2220
          %v2224 = vadd.f32 %v2143, %v2220
          %v2225 = vadd.f32 %v2148, %v2220
          %v2226 = vadd.f32 %v2153, %v2220
          %v2227 = vadd.f32 %v2158, %v2220
          %v2228 = vadd.f32 %v2163, %v2220
          %v2229 = vadd.f32 %v2168, %v2220
          %v2230 = vadd.f32 %v2173, %v2220
          %v2231 = vadd.f32 %v2178, %v2220
          %v2232 = vadd.f32 %v2183, %v2220
          %v2233 = vadd.f32 %v2188, %v2220
          %v2234 = vadd.f32 %v2193, %v2220
          %v2235 = vadd.f32 %v2198, %v2220
          %v2236 = vadd.f32 %v2203, %v2220
          %v2237 = vadd.f32 %v2208, %v2220
          %2238 = vst.msk [vmem:[%s495] sm:$0xff] %vm788, %v2222
          %2239 = vst.msk [vmem:[%s495 + $0x8] sm:$0xff] %vm788, %v2223
          %2240 = vst.msk [vmem:[%s495 + $0x10] sm:$0xff] %vm788, %v2224
          %2241 = vst.msk [vmem:[%s495 + $0x18] sm:$0xff] %vm788, %v2225
          %2242 = vst.msk [vmem:[%s495 + $0x20] sm:$0xff] %vm788, %v2226
          %2243 = vst.msk [vmem:[%s495 + $0x28] sm:$0xff] %vm788, %v2227
          %2244 = vst.msk [vmem:[%s495 + $0x30] sm:$0xff] %vm788, %v2228
          %2245 = vst.msk [vmem:[%s495 + $0x38] sm:$0xff] %vm788, %v2229
          %2246 = vst.msk [vmem:[%s495 + $0x40] sm:$0xff] %vm788, %v2230
          %2247 = vst.msk [vmem:[%s495 + $0x48] sm:$0xff] %vm788, %v2231
          %2248 = vst.msk [vmem:[%s495 + $0x50] sm:$0xff] %vm788, %v2232
          %2249 = vst.msk [vmem:[%s495 + $0x58] sm:$0xff] %vm788, %v2233
          %2250 = vst.msk [vmem:[%s495 + $0x60] sm:$0xff] %vm788, %v2234
          %2251 = vst.msk [vmem:[%s495 + $0x68] sm:$0xff] %vm788, %v2235
          %2252 = vst.msk [vmem:[%s495 + $0x70] sm:$0xff] %vm788, %v2236
          %2253 = vst.msk [vmem:[%s495 + $0x78] sm:$0xff] %vm788, %v2237
        $region64: #{tpu_custom_call.1} parent=59 // pred_fallthru
          _
        %p2254 = scmp.ne.s32.totalorder %s27, 0
        // Predicated region
        $region65: #{tpu_custom_call.1} parent=59 // pred_check
          %p2255 = pneg %p2254
        $region66: #{tpu_custom_call.1} parent=59 // pred_check_branch
          %2257 = sbr.rel (%p2255) target = $region68
        $region67: #{tpu_custom_call.1} parent=59 // pred_region
          %v2258 = vld [vmem:[%s495] sm:$0xff]
          %v2259 = vld [vmem:[%s495 + $0x8] sm:$0xff]
          %v2260 = vld [vmem:[%s495 + $0x10] sm:$0xff]
          %v2261 = vld [vmem:[%s495 + $0x18] sm:$0xff]
          %v2262 = vld [vmem:[%s495 + $0x20] sm:$0xff]
          %v2263 = vld [vmem:[%s495 + $0x28] sm:$0xff]
          %v2264 = vld [vmem:[%s495 + $0x30] sm:$0xff]
          %v2265 = vld [vmem:[%s495 + $0x38] sm:$0xff]
          %v2266 = vld [vmem:[%s495 + $0x40] sm:$0xff]
          %v2267 = vld [vmem:[%s495 + $0x48] sm:$0xff]
          %v2268 = vld [vmem:[%s495 + $0x50] sm:$0xff]
          %v2269 = vld [vmem:[%s495 + $0x58] sm:$0xff]
          %v2270 = vld [vmem:[%s495 + $0x60] sm:$0xff]
          %v2271 = vld [vmem:[%s495 + $0x68] sm:$0xff]
          %v2272 = vld [vmem:[%s495 + $0x70] sm:$0xff]
          %v2273 = vld [vmem:[%s495 + $0x78] sm:$0xff]
          %v2274 = vadd.f32 %v2258, %v2133
          %v2275 = vadd.f32 %v2259, %v2138
          %v2276 = vadd.f32 %v2260, %v2143
          %v2277 = vadd.f32 %v2261, %v2148
          %v2278 = vadd.f32 %v2262, %v2153
          %v2279 = vadd.f32 %v2263, %v2158
          %v2280 = vadd.f32 %v2264, %v2163
          %v2281 = vadd.f32 %v2265, %v2168
          %v2282 = vadd.f32 %v2266, %v2173
          %v2283 = vadd.f32 %v2267, %v2178
          %v2284 = vadd.f32 %v2268, %v2183
          %v2285 = vadd.f32 %v2269, %v2188
          %v2286 = vadd.f32 %v2270, %v2193
          %v2287 = vadd.f32 %v2271, %v2198
          %v2288 = vadd.f32 %v2272, %v2203
          %v2289 = vadd.f32 %v2273, %v2208
          %2290 = vst.msk [vmem:[%s495] sm:$0xff] %vm788, %v2274
          %2291 = vst.msk [vmem:[%s495 + $0x8] sm:$0xff] %vm788, %v2275
          %2292 = vst.msk [vmem:[%s495 + $0x10] sm:$0xff] %vm788, %v2276
          %2293 = vst.msk [vmem:[%s495 + $0x18] sm:$0xff] %vm788, %v2277
          %2294 = vst.msk [vmem:[%s495 + $0x20] sm:$0xff] %vm788, %v2278
          %2295 = vst.msk [vmem:[%s495 + $0x28] sm:$0xff] %vm788, %v2279
          %2296 = vst.msk [vmem:[%s495 + $0x30] sm:$0xff] %vm788, %v2280
          %2297 = vst.msk [vmem:[%s495 + $0x38] sm:$0xff] %vm788, %v2281
          %2298 = vst.msk [vmem:[%s495 + $0x40] sm:$0xff] %vm788, %v2282
          %2299 = vst.msk [vmem:[%s495 + $0x48] sm:$0xff] %vm788, %v2283
          %2300 = vst.msk [vmem:[%s495 + $0x50] sm:$0xff] %vm788, %v2284
          %2301 = vst.msk [vmem:[%s495 + $0x58] sm:$0xff] %vm788, %v2285
          %2302 = vst.msk [vmem:[%s495 + $0x60] sm:$0xff] %vm788, %v2286
          %2303 = vst.msk [vmem:[%s495 + $0x68] sm:$0xff] %vm788, %v2287
          %2304 = vst.msk [vmem:[%s495 + $0x70] sm:$0xff] %vm788, %v2288
          %2305 = vst.msk [vmem:[%s495 + $0x78] sm:$0xff] %vm788, %v2289
        $region68: #{tpu_custom_call.1} parent=59 // pred_fallthru
          _
      $region60: #{tpu_custom_call.1} parent=51 // pred_fallthru
        _
      %s2306 = smul.u32 16, %s26
      %p2307 = scmp.lt.s32.totalorder %s25, 1
      %s2308 = scalar_select %p2307, %s25, 1
      %p2309 = scmp.lt.s32.totalorder %s2306, 15
      %s2310 = scalar_select %p2309, %s2306, 15
      %s2311 = smul.addr %s2308, 16
      %s2312 = sadd.s32 %s2310, %s2311
      %s2313 = smul.addr %s2312, 8
      %s2314 = scalar_lea.vmem %s8, %s2313
      // Predicated region
      $region69: #{tpu_custom_call.1} parent=51 // pred_check
        %p2315 = pneg %p274
      $region70: #{tpu_custom_call.1} parent=51 // pred_check_branch
        %2317 = sbr.rel (%p2315) target = $region72
      $region71: #{tpu_custom_call.1} parent=51 // pred_region
        %s2318 = smul.u32 16, %s26
      $region72: #{tpu_custom_call.1} parent=51 // pred_fallthru
        _
    $region52: #{tpu_custom_call.1} parent=5 // pred_fallthru
      _
    %p2319 = scmp.le.s32.totalorder 2, %s14
    // Predicated region
    $region73: #{tpu_custom_call.1} parent=5 // pred_check
      %p2320 = pneg %p2319
    $region74: #{tpu_custom_call.1} parent=5 // pred_check_branch
      %2322 = sbr.rel (%p2320) target = $region76
    $region75: #{tpu_custom_call.1} parent=5 // pred_region
      %s2323 = ssub.s32 %s14, 2
      // Predicated region
      $region77: #{tpu_custom_call.1} parent=75 // pred_check
        %p2324 = pneg %p280
      $region78: #{tpu_custom_call.1} parent=75 // pred_check_branch
        %2326 = sbr.rel (%p2324) target = $region80
      $region79: #{tpu_custom_call.1} parent=75 // pred_region
        %s2327 = smul.u32 16, %s30
        %p2328 = scmp.lt.s32.totalorder %s29, 1
        %s2329 = scalar_select %p2328, %s29, 1
        %p2330 = scmp.lt.s32.totalorder %s2327, 15
        %s2331 = scalar_select %p2330, %s2327, 15
        %s2332 = smul.addr %s2329, 16
        %s2333 = sadd.s32 %s2331, %s2332
        %s2334 = smul.addr %s2333, 8
        %s2335 = scalar_lea.vmem %s8, %s2334
      $region80: #{tpu_custom_call.1} parent=75 // pred_fallthru
        _
    $region76: #{tpu_custom_call.1} parent=5 // pred_fallthru
      _
  $region6: #{tpu_custom_call.1} parent=0 // loop_footer
    %s18 = sadd.s32 1, %s14
  $region7: #{tpu_custom_call.1} parent=0 // loop_footer_branch
    %13 = sbr.rel target = $region3
  $region8: #{tpu_custom_call.1} parent=0 // loop_exit
    _

</llo_original>
